<compile_context>
chip_gen: v7x
topology: tpu7x:2x2x1
jax: 0.10.0
libtpu: 0.0.40
codegen_flags: <defaults>
</compile_context>

<pallas_src>
import functools

import numpy as np
import jax
import jax.numpy as jnp
from jax import lax
from jax.experimental import pallas as pl
from jax.experimental.pallas import tpu as pltpu

SP = 16          # stacked/padded channel rows (3 branches x 3 ch + 3 ch input + const row)
BIAS_ROW = 15    # constant-1 row used for bias folding


# ------------------------------ fused Pallas kernel ------------------------------ #

def _mtcn_fused_kernel(x_ref, w_ref, *rest, L, N, features_only):
    """Entire MultiTemporalConvNet forward for the whole batch.

    Activation layout: (16, N*L) f32 -- stacked channels on sublanes,
    batch x time packed on the lane axis (lane index = n*L + t), row 15 == 1.
    Weight slab layout (w_ref, shape (19,16,16)):
      [0]            R   (residual / concat replication matrix, shared by both stages)
      [1+9*s + 0..8] stage s: Wc1a, Wc1b, Wc2a, Wc2b, Wh1a, Wh1b, Wh2a, Wh2b, Whd
    Biases are folded into column 15 of the tap-b / downsample matrices.
    """
    if features_only:
        (out_ref,) = rest
    else:
        wlin_ref, blin_ref, out_ref = rest

    f32 = jnp.float32
    x0 = x_ref[...]                                   # (16, N*L)
    nl = x0.shape[-1]

    # ---- hoisted masks (computed once, reused by both stages / all 8 convs) ----
    t_pos = lax.broadcasted_iota(jnp.int32, (SP, nl), 1) % L
    row = lax.broadcasted_iota(jnp.int32, (SP, nl), 0)
    sel1 = ((row < 3) & (t_pos >= 1)).astype(f32)                  # branch 1, d=1
    sel2 = ((row >= 3) & (row < 6) & (t_pos >= 2)).astype(f32)     # branch 2, d=2
    sel3 = ((row >= 6) & (row < 9) & (t_pos >= 4)).astype(f32)     # branch 3, d=4
    mask1 = (t_pos >= 1).astype(f32)                               # head convs, d=1

    def mm(i, v):                                     # (16,16) @ (16, N*L) on the MXU
        return jnp.dot(w_ref[i], v, preferred_element_type=f32)

    def shift_branches(a):
        # Per-branch causal shift of the stacked tap-a product.  pltpu.roll is a
        # circular XLU lane rotation; the masks zero t < d (also killing the
        # wrap-around across batch-segment boundaries) and select the rows of
        # the matching branch.  Padding rows (9-15) become 0.
        return (pltpu.roll(a, shift=1, axis=1) * sel1
                + pltpu.roll(a, shift=2, axis=1) * sel2
                + pltpu.roll(a, shift=4, axis=1) * sel3)

    def shift1(a):                                    # d = 1 causal shift (head blocks)
        return pltpu.roll(a, shift=1, axis=1) * mask1

    def stage(v, base):
        # v: (16, N*L) stage input: rows 0-2 = channels, 3-14 = 0, row 15 = 1.
        # Three dilation branches (3->3), stacked.
        h = jnp.maximum(shift_branches(mm(base + 0, v)) + mm(base + 1, v), 0.0)   # conv1+chomp+relu
        h = jnp.maximum(shift_branches(mm(base + 2, h)) + mm(base + 3, h), 0.0)   # conv2+chomp+relu
        # Residual + implicit torch.cat: rows 0-8 -> y_b = h_b + v, rows 9-11 -> v, row 15 -> 1.
        head_in = h + mm(0, v)                                                     # R @ v
        # Head block (12 -> Co) with downsample residual.
        g = jnp.maximum(shift1(mm(base + 4, head_in)) + mm(base + 5, head_in), 0.0)
        g = jnp.maximum(shift1(mm(base + 6, g)) + mm(base + 7, g), 0.0)
        return g + mm(base + 8, head_in)

    h1 = stage(x0, 1)           # stage 1: layer1_* + head1   -> rows 0-2 = 3 channels
    h2 = stage(h1, 10)          # stage 2: layer2_* + head2   -> row 0 = 1 channel

    feat = h2[0:1, :]           # (1, N*L)

    if features_only:
        out_ref[...] = feat.astype(out_ref.dtype)
        return

    # Final Linear(L -> out) per length-L batch segment + Sigmoid (EUP).
    wlin = wlin_ref[...]        # (L, out_pad), lane-dense padded output
    blin = blin_ref[...]        # (1, out_pad)
    # TODO(synk): for large N switch to a batch grid axis / one (N,L)@(L,out) matmul.
    for n in range(N):
        seg = feat[:, n * L:(n + 1) * L]                                   # (1, L) static slice
        logit = jnp.dot(seg, wlin, preferred_element_type=f32) + blin
        out_ref[n:n + 1, :] = jax.nn.sigmoid(logit).astype(out_ref.dtype)


# ------------------------------- host-side packing ------------------------------- #

def _embed(w, r0=0, c0=0, size=SP):
    out = jnp.zeros((size, size), jnp.float32)
    return out.at[r0:r0 + w.shape[0], c0:c0 + w.shape[1]].set(w.astype(jnp.float32))


def _replication_matrix():
    # R @ x tiles x's channel rows (0-2) into row groups [0:3],[3:6],[6:9],[9:12].
    r = np.zeros((SP, SP), np.float32)
    for i in range(12):
        r[i, i % 3] = 1.0
    return jnp.asarray(r)


def _stage_mats(b1, b2, b3, h):
    """Pack one stage (3 dilation blocks + head block) into nine (16,16) matrices."""
    C = 3
    branches = [b1, b2, b3]

    def stacked(tap):      # conv1: all branches read the same 3-channel input
        m = jnp.zeros((SP, SP), jnp.float32)
        for i, blk in enumerate(branches):
            m = m.at[i * C:(i + 1) * C, 0:C].set(blk["w1"][:, :, tap])
        return m

    def blockdiag(tap):    # conv2: each branch reads its own rows
        m = jnp.zeros((SP, SP), jnp.float32)
        for i, blk in enumerate(branches):
            m = m.at[i * C:(i + 1) * C, i * C:(i + 1) * C].set(blk["w2"][:, :, tap])
        return m

    wc1a = stacked(0)
    wc1b = stacked(1)
    wc2a = blockdiag(0)
    wc2b = blockdiag(1)
    for i, blk in enumerate(branches):                 # fold biases into tap-b column 15
        wc1b = wc1b.at[i * C:(i + 1) * C, BIAS_ROW].set(blk["b1"])
        wc2b = wc2b.at[i * C:(i + 1) * C, BIAS_ROW].set(blk["b2"])
    wc1b = wc1b.at[BIAS_ROW, BIAS_ROW].set(1.0)        # propagate the constant-1 row
    wc2b = wc2b.at[BIAS_ROW, BIAS_ROW].set(1.0)

    co = h["w1"].shape[0]
    wh1a = _embed(h["w1"][:, :, 0])
    wh1b = _embed(h["w1"][:, :, 1]).at[0:co, BIAS_ROW].set(h["b1"]).at[BIAS_ROW, BIAS_ROW].set(1.0)
    wh2a = _embed(h["w2"][:, :, 0])
    wh2b = _embed(h["w2"][:, :, 1]).at[0:co, BIAS_ROW].set(h["b2"]).at[BIAS_ROW, BIAS_ROW].set(1.0)
    whd = _embed(h["wd"][:, :, 0]).at[0:co, BIAS_ROW].set(h["bd"])
    return [wc1a, wc1b, wc2a, wc2b, wh1a, wh1b, wh2a, wh2b, whd]


def multi_temporal_conv_net(x, params, features_only=False):
    """Forward pass matching MultiTemporalConvNet.forward. x: (N, 3, L)."""
    N, C, L = x.shape
    out_len = params["linear_w"].shape[0]
    nl = N * L

    # (N, C, L) -> (C, N*L): channels on sublanes, batch x time on lanes; pad rows
    # to the 16-row stacked layout and plant the constant-1 bias row.
    x_packed = jnp.transpose(x, (1, 0, 2)).reshape(C, nl).astype(jnp.float32)
    x_pad = (jnp.zeros((SP, nl), jnp.float32)
             .at[0:C, :].set(x_packed)
             .at[BIAS_ROW, :].set(1.0))

    # One weight slab: [R, stage1 (9 mats), stage2 (9 mats)] -> (19, 16, 16).
    w_slab = jnp.stack(
        [_replication_matrix()]
        + _stage_mats(params["layer1_1"], params["layer1_2"], params["layer1_3"], params["head1"])
        + _stage_mats(params["layer2_1"], params["layer2_2"], params["layer2_3"], params["head2"]))

    kern = functools.partial(_mtcn_fused_kernel, L=L, N=N, features_only=features_only)

    if features_only:
        feat_flat = pl.pallas_call(
            kern, out_shape=jax.ShapeDtypeStruct((1, nl), jnp.float32),
        )(x_pad, w_slab)
        return feat_flat.reshape(N, L)[:, None, :]                    # (N, 1, L)

    # Final Linear: single (L, out_pad) weight (no kron), lane-dense padded output.
    out_pad = max(128, ((out_len + 127) // 128) * 128)
    wlin_pad = jnp.zeros((L, out_pad), jnp.float32).at[:, :out_len].set(params["linear_w"].T)
    blin_pad = jnp.zeros((1, out_pad), jnp.float32).at[0, :out_len].set(params["linear_b"])

    prob = pl.pallas_call(
        kern, out_shape=jax.ShapeDtypeStruct((N, out_pad), jnp.float32),
    )(x_pad, w_slab, wlin_pad, blin_pad)
    return prob[:, :out_len]


# --------------------------- pure-JAX reference (XLA) --------------------------- #

def _ref_causal_conv(x, w, b, d):
    Lx = x.shape[-1]
    x_shift = jnp.pad(x, ((0, 0), (0, 0), (d, 0)))[:, :, :Lx]
    return (jnp.einsum("oc,ncl->nol", w[:, :, 0], x_shift)
            + jnp.einsum("oc,ncl->nol", w[:, :, 1], x)
            + b[None, :, None])


def _ref_block(x, p, d):
    h = jax.nn.relu(_ref_causal_conv(x, p["w1"], p["b1"], d))
    h = jax.nn.relu(_ref_causal_conv(h, p["w2"], p["b2"], d))
    if "wd" in p:
        res = jnp.einsum("oc,ncl->nol", p["wd"][:, :, 0], x) + p["bd"][None, :, None]
    else:
        res = x
    return h + res


def _ref_forward(x, params, features_only=False):
    x1 = _ref_block(x, params["layer1_1"], 1)
    x2 = _ref_block(x, params["layer1_2"], 2)
    x3 = _ref_block(x, params["layer1_3"], 4)
    xc = jnp.concatenate([x1, x2, x3, x], axis=1)
    h = _ref_block(xc, params["head1"], 1)
    x1 = _ref_block(h, params["layer2_1"], 1)
    x2 = _ref_block(h, params["layer2_2"], 2)
    x3 = _ref_block(h, params["layer2_3"], 4)
    xc = jnp.concatenate([x1, x2, x3, h], axis=1)
    feat = _ref_block(xc, params["head2"], 1)
    if features_only:
        return feat
    logits = feat[:, 0, :] @ params["linear_w"].T + params["linear_b"]
    return jax.nn.sigmoid(logits)


# -------------------------------- Parameter init -------------------------------- #

def init_block_params(key, c_in, c_out, scale=0.1):
    ks = jax.random.split(key, 6)
    p = {
        "w1": scale * jax.random.normal(ks[0], (c_out, c_in, 2), jnp.float32),
        "b1": scale * jax.random.normal(ks[1], (c_out,), jnp.float32),
        "w2": scale * jax.random.normal(ks[2], (c_out, c_out, 2), jnp.float32),
        "b2": scale * jax.random.normal(ks[3], (c_out,), jnp.float32),
    }
    if c_in != c_out:  # downsample 1x1 conv only when channel counts differ
        p["wd"] = scale * jax.random.normal(ks[4], (c_out, c_in, 1), jnp.float32)
        p["bd"] = scale * jax.random.normal(ks[5], (c_out,), jnp.float32)
    return p


def init_params(key, input_length, out_length):
    keys = jax.random.split(key, 10)
    return {
        "layer1_1": init_block_params(keys[0], 3, 3),
        "layer1_2": init_block_params(keys[1], 3, 3),
        "layer1_3": init_block_params(keys[2], 3, 3),
        "head1":    init_block_params(keys[3], 12, 3),
        "layer2_1": init_block_params(keys[4], 3, 3),
        "layer2_2": init_block_params(keys[5], 3, 3),
        "layer2_3": init_block_params(keys[6], 3, 3),
        "head2":    init_block_params(keys[7], 12, 1),
        "linear_w": 0.1 * jax.random.normal(keys[8], (out_length, input_length), jnp.float32),
        "linear_b": 0.1 * jax.random.normal(keys[9], (out_length,), jnp.float32),
    }


# ------------------------------------ Driver ------------------------------------ #

if __name__ == "__main__":
    N, C, INPUT_LENGTH, OUT_LENGTH = 2, 3, 128, 16   # args.input_length / args.out_length
    key = jax.random.PRNGKey(0)
    kx, kp = jax.random.split(key)
    x = jax.random.normal(kx, (N, C, INPUT_LENGTH), jnp.float32)
    params = init_params(kp, INPUT_LENGTH, OUT_LENGTH)

    fwd = jax.jit(multi_temporal_conv_net)
    out = jax.block_until_ready(fwd(x, params))
    assert out.shape == (N, OUT_LENGTH) and out.dtype == jnp.float32

    feat = jax.block_until_ready(
        jax.jit(functools.partial(multi_temporal_conv_net, features_only=True))(x, params))
    assert feat.shape == (N, 1, INPUT_LENGTH)

    # Sanity check vs. a pure-JAX/XLA reference.  Tolerance covers the default
    # (reduced-precision) f32 MXU matmul paths on both sides, tightened vs. the
    # previous 8e-2.
    ref_out = jax.block_until_ready(jax.jit(_ref_forward)(x, params))
    ref_feat = jax.block_until_ready(
        jax.jit(functools.partial(_ref_forward, features_only=True))(x, params))
    assert bool(jnp.allclose(feat, ref_feat, rtol=2e-2, atol=2e-2)), (
        "feature mismatch vs reference")
    assert bool(jnp.allclose(out, ref_out, rtol=2e-2, atol=2e-2)), (
        "output mismatch vs reference")

    print("KERNEL_OK")
</pallas_src>

<mosaic_0001>
module attributes {stable_mosaic.version = 11 : i64} {
  func.func @_mtcn_fused_kernel(%arg0: memref<16x256xf32, #tpu.memory_space<vmem>>, %arg1: memref<19x16x16xf32, #tpu.memory_space<vmem>>, %arg2: memref<128x128xf32, #tpu.memory_space<vmem>>, %arg3: memref<1x128xf32, #tpu.memory_space<vmem>>, %arg4: memref<2x128xf32, #tpu.memory_space<vmem>>) attributes {dimension_semantics = [], scalar_prefetch = 0 : i64, scratch_operands = 0 : i64, tpu.core_type = #tpu.core_type<tc>} {
    %c0 = arith.constant 0 : index
    %c0_0 = arith.constant 0 : index
    %0 = vector.load %arg0[%c0, %c0_0] : memref<16x256xf32, #tpu.memory_space<vmem>>, vector<16x256xf32>
    %1 = tpu.iota {dimensions = array<i32: 1>} : vector<16x256xi32>
    %c128_i32 = arith.constant 128 : i32
    %c0_i32 = arith.constant 0 : i32
    %2 = arith.cmpi eq, %c128_i32, %c0_i32 : i32
    %c1_i32 = arith.constant 1 : i32
    %3 = arith.select %2, %c1_i32, %c128_i32 : i32
    %4 = vector.broadcast %3 : i32 to vector<16x256xi32>
    %5 = arith.remsi %1, %4 : vector<16x256xi32>
    %c0_i32_1 = arith.constant 0 : i32
    %6 = vector.broadcast %c0_i32_1 : i32 to vector<16x256xi32>
    %7 = arith.cmpi ne, %5, %6 : vector<16x256xi32>
    %c0_i32_2 = arith.constant 0 : i32
    %8 = vector.broadcast %c0_i32_2 : i32 to vector<16x256xi32>
    %9 = arith.cmpi slt, %5, %8 : vector<16x256xi32>
    %c0_i32_3 = arith.constant 0 : i32
    %10 = arith.cmpi slt, %3, %c0_i32_3 : i32
    %11 = vector.broadcast %10 : i1 to vector<16x256xi1>
    %12 = vector.broadcast %11 : vector<16x256xi1> to vector<16x256xi1>
    %13 = arith.xori %9, %12 : vector<16x256xi1>
    %14 = arith.andi %13, %7 : vector<16x256xi1>
    %15 = vector.broadcast %3 : i32 to vector<16x256xi32>
    %16 = arith.addi %5, %15 : vector<16x256xi32>
    %17 = arith.select %14, %16, %5 : vector<16x256xi1>, vector<16x256xi32>
    %18 = tpu.iota {dimensions = array<i32: 0>} : vector<16x256xi32>
    %c3_i32 = arith.constant 3 : i32
    %19 = vector.broadcast %c3_i32 : i32 to vector<16x256xi32>
    %20 = arith.cmpi slt, %18, %19 : vector<16x256xi32>
    %c1_i32_4 = arith.constant 1 : i32
    %21 = vector.broadcast %c1_i32_4 : i32 to vector<16x256xi32>
    %22 = arith.cmpi sge, %17, %21 : vector<16x256xi32>
    %23 = arith.andi %20, %22 : vector<16x256xi1>
    %24 = arith.extui %23 : vector<16x256xi1> to vector<16x256xi32>
    %25 = arith.sitofp %24 : vector<16x256xi32> to vector<16x256xf32>
    %c3_i32_5 = arith.constant 3 : i32
    %26 = vector.broadcast %c3_i32_5 : i32 to vector<16x256xi32>
    %27 = arith.cmpi sge, %18, %26 : vector<16x256xi32>
    %c6_i32 = arith.constant 6 : i32
    %28 = vector.broadcast %c6_i32 : i32 to vector<16x256xi32>
    %29 = arith.cmpi slt, %18, %28 : vector<16x256xi32>
    %30 = arith.andi %27, %29 : vector<16x256xi1>
    %c2_i32 = arith.constant 2 : i32
    %31 = vector.broadcast %c2_i32 : i32 to vector<16x256xi32>
    %32 = arith.cmpi sge, %17, %31 : vector<16x256xi32>
    %33 = arith.andi %30, %32 : vector<16x256xi1>
    %34 = arith.extui %33 : vector<16x256xi1> to vector<16x256xi32>
    %35 = arith.sitofp %34 : vector<16x256xi32> to vector<16x256xf32>
    %c6_i32_6 = arith.constant 6 : i32
    %36 = vector.broadcast %c6_i32_6 : i32 to vector<16x256xi32>
    %37 = arith.cmpi sge, %18, %36 : vector<16x256xi32>
    %c9_i32 = arith.constant 9 : i32
    %38 = vector.broadcast %c9_i32 : i32 to vector<16x256xi32>
    %39 = arith.cmpi slt, %18, %38 : vector<16x256xi32>
    %40 = arith.andi %37, %39 : vector<16x256xi1>
    %c4_i32 = arith.constant 4 : i32
    %41 = vector.broadcast %c4_i32 : i32 to vector<16x256xi32>
    %42 = arith.cmpi sge, %17, %41 : vector<16x256xi32>
    %43 = arith.andi %40, %42 : vector<16x256xi1>
    %44 = arith.extui %43 : vector<16x256xi1> to vector<16x256xi32>
    %45 = arith.sitofp %44 : vector<16x256xi32> to vector<16x256xf32>
    %c1_i32_7 = arith.constant 1 : i32
    %46 = vector.broadcast %c1_i32_7 : i32 to vector<16x256xi32>
    %47 = arith.cmpi sge, %17, %46 : vector<16x256xi32>
    %48 = arith.extui %47 : vector<16x256xi1> to vector<16x256xi32>
    %49 = arith.sitofp %48 : vector<16x256xi32> to vector<16x256xf32>
    %c1 = arith.constant 1 : index
    %c0_8 = arith.constant 0 : index
    %c0_9 = arith.constant 0 : index
    %50 = vector.load %arg1[%c1, %c0_8, %c0_9] : memref<19x16x16xf32, #tpu.memory_space<vmem>>, vector<1x16x16xf32>
    %51 = vector.shape_cast %50 : vector<1x16x16xf32> to vector<16x16xf32>
    %cst = arith.constant dense<0.000000e+00> : vector<16x256xf32>
    %52 = tpu.matmul %51, %0, %cst {dimension_numbers = #tpu.dot_dimension_numbers<[1], [0], [0], [1], [0, 0, 1, 1], [], []>} : vector<16x16xf32>, vector<16x256xf32>, vector<16x256xf32> -> vector<16x256xf32>
    %c1_i32_10 = arith.constant 1 : i32
    %53 = tpu.dynamic_rotate %52 by %c1_i32_10 dim 1 : vector<16x256xf32>, i32 -> vector<16x256xf32>
    %54 = arith.mulf %53, %25 : vector<16x256xf32>
    %c2_i32_11 = arith.constant 2 : i32
    %55 = tpu.dynamic_rotate %52 by %c2_i32_11 dim 1 : vector<16x256xf32>, i32 -> vector<16x256xf32>
    %56 = arith.mulf %55, %35 : vector<16x256xf32>
    %57 = arith.addf %54, %56 : vector<16x256xf32>
    %c4_i32_12 = arith.constant 4 : i32
    %58 = tpu.dynamic_rotate %52 by %c4_i32_12 dim 1 : vector<16x256xf32>, i32 -> vector<16x256xf32>
    %59 = arith.mulf %58, %45 : vector<16x256xf32>
    %60 = arith.addf %57, %59 : vector<16x256xf32>
    %c2 = arith.constant 2 : index
    %c0_13 = arith.constant 0 : index
    %c0_14 = arith.constant 0 : index
    %61 = vector.load %arg1[%c2, %c0_13, %c0_14] : memref<19x16x16xf32, #tpu.memory_space<vmem>>, vector<1x16x16xf32>
    %62 = vector.shape_cast %61 : vector<1x16x16xf32> to vector<16x16xf32>
    %cst_15 = arith.constant dense<0.000000e+00> : vector<16x256xf32>
    %63 = tpu.matmul %62, %0, %cst_15 {dimension_numbers = #tpu.dot_dimension_numbers<[1], [0], [0], [1], [0, 0, 1, 1], [], []>} : vector<16x16xf32>, vector<16x256xf32>, vector<16x256xf32> -> vector<16x256xf32>
    %64 = arith.addf %60, %63 : vector<16x256xf32>
    %cst_16 = arith.constant 0.000000e+00 : f32
    %65 = vector.broadcast %cst_16 : f32 to vector<16x256xf32>
    %66 = arith.maximumf %64, %65 : vector<16x256xf32>
    %c3 = arith.constant 3 : index
    %c0_17 = arith.constant 0 : index
    %c0_18 = arith.constant 0 : index
    %67 = vector.load %arg1[%c3, %c0_17, %c0_18] : memref<19x16x16xf32, #tpu.memory_space<vmem>>, vector<1x16x16xf32>
    %68 = vector.shape_cast %67 : vector<1x16x16xf32> to vector<16x16xf32>
    %cst_19 = arith.constant dense<0.000000e+00> : vector<16x256xf32>
    %69 = tpu.matmul %68, %66, %cst_19 {dimension_numbers = #tpu.dot_dimension_numbers<[1], [0], [0], [1], [0, 0, 1, 1], [], []>} : vector<16x16xf32>, vector<16x256xf32>, vector<16x256xf32> -> vector<16x256xf32>
    %c1_i32_20 = arith.constant 1 : i32
    %70 = tpu.dynamic_rotate %69 by %c1_i32_20 dim 1 : vector<16x256xf32>, i32 -> vector<16x256xf32>
    %71 = arith.mulf %70, %25 : vector<16x256xf32>
    %c2_i32_21 = arith.constant 2 : i32
    %72 = tpu.dynamic_rotate %69 by %c2_i32_21 dim 1 : vector<16x256xf32>, i32 -> vector<16x256xf32>
    %73 = arith.mulf %72, %35 : vector<16x256xf32>
    %74 = arith.addf %71, %73 : vector<16x256xf32>
    %c4_i32_22 = arith.constant 4 : i32
    %75 = tpu.dynamic_rotate %69 by %c4_i32_22 dim 1 : vector<16x256xf32>, i32 -> vector<16x256xf32>
    %76 = arith.mulf %75, %45 : vector<16x256xf32>
    %77 = arith.addf %74, %76 : vector<16x256xf32>
    %c4 = arith.constant 4 : index
    %c0_23 = arith.constant 0 : index
    %c0_24 = arith.constant 0 : index
    %78 = vector.load %arg1[%c4, %c0_23, %c0_24] : memref<19x16x16xf32, #tpu.memory_space<vmem>>, vector<1x16x16xf32>
    %79 = vector.shape_cast %78 : vector<1x16x16xf32> to vector<16x16xf32>
    %cst_25 = arith.constant dense<0.000000e+00> : vector<16x256xf32>
    %80 = tpu.matmul %79, %66, %cst_25 {dimension_numbers = #tpu.dot_dimension_numbers<[1], [0], [0], [1], [0, 0, 1, 1], [], []>} : vector<16x16xf32>, vector<16x256xf32>, vector<16x256xf32> -> vector<16x256xf32>
    %81 = arith.addf %77, %80 : vector<16x256xf32>
    %cst_26 = arith.constant 0.000000e+00 : f32
    %82 = vector.broadcast %cst_26 : f32 to vector<16x256xf32>
    %83 = arith.maximumf %81, %82 : vector<16x256xf32>
    %c0_27 = arith.constant 0 : index
    %c0_28 = arith.constant 0 : index
    %c0_29 = arith.constant 0 : index
    %84 = vector.load %arg1[%c0_27, %c0_28, %c0_29] : memref<19x16x16xf32, #tpu.memory_space<vmem>>, vector<1x16x16xf32>
    %85 = vector.shape_cast %84 : vector<1x16x16xf32> to vector<16x16xf32>
    %cst_30 = arith.constant dense<0.000000e+00> : vector<16x256xf32>
    %86 = tpu.matmul %85, %0, %cst_30 {dimension_numbers = #tpu.dot_dimension_numbers<[1], [0], [0], [1], [0, 0, 1, 1], [], []>} : vector<16x16xf32>, vector<16x256xf32>, vector<16x256xf32> -> vector<16x256xf32>
    %87 = arith.addf %83, %86 : vector<16x256xf32>
    %c5 = arith.constant 5 : index
    %c0_31 = arith.constant 0 : index
    %c0_32 = arith.constant 0 : index
    %88 = vector.load %arg1[%c5, %c0_31, %c0_32] : memref<19x16x16xf32, #tpu.memory_space<vmem>>, vector<1x16x16xf32>
    %89 = vector.shape_cast %88 : vector<1x16x16xf32> to vector<16x16xf32>
    %cst_33 = arith.constant dense<0.000000e+00> : vector<16x256xf32>
    %90 = tpu.matmul %89, %87, %cst_33 {dimension_numbers = #tpu.dot_dimension_numbers<[1], [0], [0], [1], [0, 0, 1, 1], [], []>} : vector<16x16xf32>, vector<16x256xf32>, vector<16x256xf32> -> vector<16x256xf32>
    %c1_i32_34 = arith.constant 1 : i32
    %91 = tpu.dynamic_rotate %90 by %c1_i32_34 dim 1 : vector<16x256xf32>, i32 -> vector<16x256xf32>
    %92 = arith.mulf %91, %49 : vector<16x256xf32>
    %c6 = arith.constant 6 : index
    %c0_35 = arith.constant 0 : index
    %c0_36 = arith.constant 0 : index
    %93 = vector.load %arg1[%c6, %c0_35, %c0_36] : memref<19x16x16xf32, #tpu.memory_space<vmem>>, vector<1x16x16xf32>
    %94 = vector.shape_cast %93 : vector<1x16x16xf32> to vector<16x16xf32>
    %cst_37 = arith.constant dense<0.000000e+00> : vector<16x256xf32>
    %95 = tpu.matmul %94, %87, %cst_37 {dimension_numbers = #tpu.dot_dimension_numbers<[1], [0], [0], [1], [0, 0, 1, 1], [], []>} : vector<16x16xf32>, vector<16x256xf32>, vector<16x256xf32> -> vector<16x256xf32>
    %96 = arith.addf %92, %95 : vector<16x256xf32>
    %cst_38 = arith.constant 0.000000e+00 : f32
    %97 = vector.broadcast %cst_38 : f32 to vector<16x256xf32>
    %98 = arith.maximumf %96, %97 : vector<16x256xf32>
    %c7 = arith.constant 7 : index
    %c0_39 = arith.constant 0 : index
    %c0_40 = arith.constant 0 : index
    %99 = vector.load %arg1[%c7, %c0_39, %c0_40] : memref<19x16x16xf32, #tpu.memory_space<vmem>>, vector<1x16x16xf32>
    %100 = vector.shape_cast %99 : vector<1x16x16xf32> to vector<16x16xf32>
    %cst_41 = arith.constant dense<0.000000e+00> : vector<16x256xf32>
    %101 = tpu.matmul %100, %98, %cst_41 {dimension_numbers = #tpu.dot_dimension_numbers<[1], [0], [0], [1], [0, 0, 1, 1], [], []>} : vector<16x16xf32>, vector<16x256xf32>, vector<16x256xf32> -> vector<16x256xf32>
    %c1_i32_42 = arith.constant 1 : i32
    %102 = tpu.dynamic_rotate %101 by %c1_i32_42 dim 1 : vector<16x256xf32>, i32 -> vector<16x256xf32>
    %103 = arith.mulf %102, %49 : vector<16x256xf32>
    %c8 = arith.constant 8 : index
    %c0_43 = arith.constant 0 : index
    %c0_44 = arith.constant 0 : index
    %104 = vector.load %arg1[%c8, %c0_43, %c0_44] : memref<19x16x16xf32, #tpu.memory_space<vmem>>, vector<1x16x16xf32>
    %105 = vector.shape_cast %104 : vector<1x16x16xf32> to vector<16x16xf32>
    %cst_45 = arith.constant dense<0.000000e+00> : vector<16x256xf32>
    %106 = tpu.matmul %105, %98, %cst_45 {dimension_numbers = #tpu.dot_dimension_numbers<[1], [0], [0], [1], [0, 0, 1, 1], [], []>} : vector<16x16xf32>, vector<16x256xf32>, vector<16x256xf32> -> vector<16x256xf32>
    %107 = arith.addf %103, %106 : vector<16x256xf32>
    %cst_46 = arith.constant 0.000000e+00 : f32
    %108 = vector.broadcast %cst_46 : f32 to vector<16x256xf32>
    %109 = arith.maximumf %107, %108 : vector<16x256xf32>
    %c9 = arith.constant 9 : index
    %c0_47 = arith.constant 0 : index
    %c0_48 = arith.constant 0 : index
    %110 = vector.load %arg1[%c9, %c0_47, %c0_48] : memref<19x16x16xf32, #tpu.memory_space<vmem>>, vector<1x16x16xf32>
    %111 = vector.shape_cast %110 : vector<1x16x16xf32> to vector<16x16xf32>
    %cst_49 = arith.constant dense<0.000000e+00> : vector<16x256xf32>
    %112 = tpu.matmul %111, %87, %cst_49 {dimension_numbers = #tpu.dot_dimension_numbers<[1], [0], [0], [1], [0, 0, 1, 1], [], []>} : vector<16x16xf32>, vector<16x256xf32>, vector<16x256xf32> -> vector<16x256xf32>
    %113 = arith.addf %109, %112 : vector<16x256xf32>
    %c10 = arith.constant 10 : index
    %c0_50 = arith.constant 0 : index
    %c0_51 = arith.constant 0 : index
    %114 = vector.load %arg1[%c10, %c0_50, %c0_51] : memref<19x16x16xf32, #tpu.memory_space<vmem>>, vector<1x16x16xf32>
    %115 = vector.shape_cast %114 : vector<1x16x16xf32> to vector<16x16xf32>
    %cst_52 = arith.constant dense<0.000000e+00> : vector<16x256xf32>
    %116 = tpu.matmul %115, %113, %cst_52 {dimension_numbers = #tpu.dot_dimension_numbers<[1], [0], [0], [1], [0, 0, 1, 1], [], []>} : vector<16x16xf32>, vector<16x256xf32>, vector<16x256xf32> -> vector<16x256xf32>
    %c1_i32_53 = arith.constant 1 : i32
    %117 = tpu.dynamic_rotate %116 by %c1_i32_53 dim 1 : vector<16x256xf32>, i32 -> vector<16x256xf32>
    %118 = arith.mulf %117, %25 : vector<16x256xf32>
    %c2_i32_54 = arith.constant 2 : i32
    %119 = tpu.dynamic_rotate %116 by %c2_i32_54 dim 1 : vector<16x256xf32>, i32 -> vector<16x256xf32>
    %120 = arith.mulf %119, %35 : vector<16x256xf32>
    %121 = arith.addf %118, %120 : vector<16x256xf32>
    %c4_i32_55 = arith.constant 4 : i32
    %122 = tpu.dynamic_rotate %116 by %c4_i32_55 dim 1 : vector<16x256xf32>, i32 -> vector<16x256xf32>
    %123 = arith.mulf %122, %45 : vector<16x256xf32>
    %124 = arith.addf %121, %123 : vector<16x256xf32>
    %c11 = arith.constant 11 : index
    %c0_56 = arith.constant 0 : index
    %c0_57 = arith.constant 0 : index
    %125 = vector.load %arg1[%c11, %c0_56, %c0_57] : memref<19x16x16xf32, #tpu.memory_space<vmem>>, vector<1x16x16xf32>
    %126 = vector.shape_cast %125 : vector<1x16x16xf32> to vector<16x16xf32>
    %cst_58 = arith.constant dense<0.000000e+00> : vector<16x256xf32>
    %127 = tpu.matmul %126, %113, %cst_58 {dimension_numbers = #tpu.dot_dimension_numbers<[1], [0], [0], [1], [0, 0, 1, 1], [], []>} : vector<16x16xf32>, vector<16x256xf32>, vector<16x256xf32> -> vector<16x256xf32>
    %128 = arith.addf %124, %127 : vector<16x256xf32>
    %cst_59 = arith.constant 0.000000e+00 : f32
    %129 = vector.broadcast %cst_59 : f32 to vector<16x256xf32>
    %130 = arith.maximumf %128, %129 : vector<16x256xf32>
    %c12 = arith.constant 12 : index
    %c0_60 = arith.constant 0 : index
    %c0_61 = arith.constant 0 : index
    %131 = vector.load %arg1[%c12, %c0_60, %c0_61] : memref<19x16x16xf32, #tpu.memory_space<vmem>>, vector<1x16x16xf32>
    %132 = vector.shape_cast %131 : vector<1x16x16xf32> to vector<16x16xf32>
    %cst_62 = arith.constant dense<0.000000e+00> : vector<16x256xf32>
    %133 = tpu.matmul %132, %130, %cst_62 {dimension_numbers = #tpu.dot_dimension_numbers<[1], [0], [0], [1], [0, 0, 1, 1], [], []>} : vector<16x16xf32>, vector<16x256xf32>, vector<16x256xf32> -> vector<16x256xf32>
    %c1_i32_63 = arith.constant 1 : i32
    %134 = tpu.dynamic_rotate %133 by %c1_i32_63 dim 1 : vector<16x256xf32>, i32 -> vector<16x256xf32>
    %135 = arith.mulf %134, %25 : vector<16x256xf32>
    %c2_i32_64 = arith.constant 2 : i32
    %136 = tpu.dynamic_rotate %133 by %c2_i32_64 dim 1 : vector<16x256xf32>, i32 -> vector<16x256xf32>
    %137 = arith.mulf %136, %35 : vector<16x256xf32>
    %138 = arith.addf %135, %137 : vector<16x256xf32>
    %c4_i32_65 = arith.constant 4 : i32
    %139 = tpu.dynamic_rotate %133 by %c4_i32_65 dim 1 : vector<16x256xf32>, i32 -> vector<16x256xf32>
    %140 = arith.mulf %139, %45 : vector<16x256xf32>
    %141 = arith.addf %138, %140 : vector<16x256xf32>
    %c13 = arith.constant 13 : index
    %c0_66 = arith.constant 0 : index
    %c0_67 = arith.constant 0 : index
    %142 = vector.load %arg1[%c13, %c0_66, %c0_67] : memref<19x16x16xf32, #tpu.memory_space<vmem>>, vector<1x16x16xf32>
    %143 = vector.shape_cast %142 : vector<1x16x16xf32> to vector<16x16xf32>
    %cst_68 = arith.constant dense<0.000000e+00> : vector<16x256xf32>
    %144 = tpu.matmul %143, %130, %cst_68 {dimension_numbers = #tpu.dot_dimension_numbers<[1], [0], [0], [1], [0, 0, 1, 1], [], []>} : vector<16x16xf32>, vector<16x256xf32>, vector<16x256xf32> -> vector<16x256xf32>
    %145 = arith.addf %141, %144 : vector<16x256xf32>
    %cst_69 = arith.constant 0.000000e+00 : f32
    %146 = vector.broadcast %cst_69 : f32 to vector<16x256xf32>
    %147 = arith.maximumf %145, %146 : vector<16x256xf32>
    %c0_70 = arith.constant 0 : index
    %c0_71 = arith.constant 0 : index
    %c0_72 = arith.constant 0 : index
    %148 = vector.load %arg1[%c0_70, %c0_71, %c0_72] : memref<19x16x16xf32, #tpu.memory_space<vmem>>, vector<1x16x16xf32>
    %149 = vector.shape_cast %148 : vector<1x16x16xf32> to vector<16x16xf32>
    %cst_73 = arith.constant dense<0.000000e+00> : vector<16x256xf32>
    %150 = tpu.matmul %149, %113, %cst_73 {dimension_numbers = #tpu.dot_dimension_numbers<[1], [0], [0], [1], [0, 0, 1, 1], [], []>} : vector<16x16xf32>, vector<16x256xf32>, vector<16x256xf32> -> vector<16x256xf32>
    %151 = arith.addf %147, %150 : vector<16x256xf32>
    %c14 = arith.constant 14 : index
    %c0_74 = arith.constant 0 : index
    %c0_75 = arith.constant 0 : index
    %152 = vector.load %arg1[%c14, %c0_74, %c0_75] : memref<19x16x16xf32, #tpu.memory_space<vmem>>, vector<1x16x16xf32>
    %153 = vector.shape_cast %152 : vector<1x16x16xf32> to vector<16x16xf32>
    %cst_76 = arith.constant dense<0.000000e+00> : vector<16x256xf32>
    %154 = tpu.matmul %153, %151, %cst_76 {dimension_numbers = #tpu.dot_dimension_numbers<[1], [0], [0], [1], [0, 0, 1, 1], [], []>} : vector<16x16xf32>, vector<16x256xf32>, vector<16x256xf32> -> vector<16x256xf32>
    %c1_i32_77 = arith.constant 1 : i32
    %155 = tpu.dynamic_rotate %154 by %c1_i32_77 dim 1 : vector<16x256xf32>, i32 -> vector<16x256xf32>
    %156 = arith.mulf %155, %49 : vector<16x256xf32>
    %c15 = arith.constant 15 : index
    %c0_78 = arith.constant 0 : index
    %c0_79 = arith.constant 0 : index
    %157 = vector.load %arg1[%c15, %c0_78, %c0_79] : memref<19x16x16xf32, #tpu.memory_space<vmem>>, vector<1x16x16xf32>
    %158 = vector.shape_cast %157 : vector<1x16x16xf32> to vector<16x16xf32>
    %cst_80 = arith.constant dense<0.000000e+00> : vector<16x256xf32>
    %159 = tpu.matmul %158, %151, %cst_80 {dimension_numbers = #tpu.dot_dimension_numbers<[1], [0], [0], [1], [0, 0, 1, 1], [], []>} : vector<16x16xf32>, vector<16x256xf32>, vector<16x256xf32> -> vector<16x256xf32>
    %160 = arith.addf %156, %159 : vector<16x256xf32>
    %cst_81 = arith.constant 0.000000e+00 : f32
    %161 = vector.broadcast %cst_81 : f32 to vector<16x256xf32>
    %162 = arith.maximumf %160, %161 : vector<16x256xf32>
    %c16 = arith.constant 16 : index
    %c0_82 = arith.constant 0 : index
    %c0_83 = arith.constant 0 : index
    %163 = vector.load %arg1[%c16, %c0_82, %c0_83] : memref<19x16x16xf32, #tpu.memory_space<vmem>>, vector<1x16x16xf32>
    %164 = vector.shape_cast %163 : vector<1x16x16xf32> to vector<16x16xf32>
    %cst_84 = arith.constant dense<0.000000e+00> : vector<16x256xf32>
    %165 = tpu.matmul %164, %162, %cst_84 {dimension_numbers = #tpu.dot_dimension_numbers<[1], [0], [0], [1], [0, 0, 1, 1], [], []>} : vector<16x16xf32>, vector<16x256xf32>, vector<16x256xf32> -> vector<16x256xf32>
    %c1_i32_85 = arith.constant 1 : i32
    %166 = tpu.dynamic_rotate %165 by %c1_i32_85 dim 1 : vector<16x256xf32>, i32 -> vector<16x256xf32>
    %167 = arith.mulf %166, %49 : vector<16x256xf32>
    %c17 = arith.constant 17 : index
    %c0_86 = arith.constant 0 : index
    %c0_87 = arith.constant 0 : index
    %168 = vector.load %arg1[%c17, %c0_86, %c0_87] : memref<19x16x16xf32, #tpu.memory_space<vmem>>, vector<1x16x16xf32>
    %169 = vector.shape_cast %168 : vector<1x16x16xf32> to vector<16x16xf32>
    %cst_88 = arith.constant dense<0.000000e+00> : vector<16x256xf32>
    %170 = tpu.matmul %169, %162, %cst_88 {dimension_numbers = #tpu.dot_dimension_numbers<[1], [0], [0], [1], [0, 0, 1, 1], [], []>} : vector<16x16xf32>, vector<16x256xf32>, vector<16x256xf32> -> vector<16x256xf32>
    %171 = arith.addf %167, %170 : vector<16x256xf32>
    %cst_89 = arith.constant 0.000000e+00 : f32
    %172 = vector.broadcast %cst_89 : f32 to vector<16x256xf32>
    %173 = arith.maximumf %171, %172 : vector<16x256xf32>
    %c18 = arith.constant 18 : index
    %c0_90 = arith.constant 0 : index
    %c0_91 = arith.constant 0 : index
    %174 = vector.load %arg1[%c18, %c0_90, %c0_91] : memref<19x16x16xf32, #tpu.memory_space<vmem>>, vector<1x16x16xf32>
    %175 = vector.shape_cast %174 : vector<1x16x16xf32> to vector<16x16xf32>
    %cst_92 = arith.constant dense<0.000000e+00> : vector<16x256xf32>
    %176 = tpu.matmul %175, %151, %cst_92 {dimension_numbers = #tpu.dot_dimension_numbers<[1], [0], [0], [1], [0, 0, 1, 1], [], []>} : vector<16x16xf32>, vector<16x256xf32>, vector<16x256xf32> -> vector<16x256xf32>
    %177 = arith.addf %173, %176 : vector<16x256xf32>
    %178 = vector.extract_strided_slice %177 {offsets = [0, 0], sizes = [1, 256], strides = [1, 1]} : vector<16x256xf32> to vector<1x256xf32>
    %c0_93 = arith.constant 0 : index
    %c0_94 = arith.constant 0 : index
    %179 = vector.load %arg2[%c0_93, %c0_94] : memref<128x128xf32, #tpu.memory_space<vmem>>, vector<128x128xf32>
    %c0_95 = arith.constant 0 : index
    %c0_96 = arith.constant 0 : index
    %180 = vector.load %arg3[%c0_95, %c0_96] : memref<1x128xf32, #tpu.memory_space<vmem>>, vector<1x128xf32>
    %181 = vector.extract_strided_slice %178 {offsets = [0, 0], sizes = [1, 128], strides = [1, 1]} : vector<1x256xf32> to vector<1x128xf32>
    %cst_97 = arith.constant dense<0.000000e+00> : vector<1x128xf32>
    %182 = tpu.matmul %181, %179, %cst_97 {dimension_numbers = #tpu.dot_dimension_numbers<[1], [0], [0], [1], [0, 0, 1, 1], [], []>} : vector<1x128xf32>, vector<128x128xf32>, vector<1x128xf32> -> vector<1x128xf32>
    %183 = arith.addf %182, %180 : vector<1x128xf32>
    %184 = arith.negf %183 : vector<1x128xf32>
    %185 = math.exp %184 : vector<1x128xf32>
    %cst_98 = arith.constant 1.000000e+00 : f32
    %186 = vector.broadcast %cst_98 : f32 to vector<1x128xf32>
    %187 = arith.addf %186, %185 : vector<1x128xf32>
    %188 = arith.divf %186, %187 : vector<1x128xf32>
    %c0_99 = arith.constant 0 : index
    %c0_100 = arith.constant 0 : index
    %189 = vector.load %arg4[%c0_99, %c0_100] : memref<2x128xf32, #tpu.memory_space<vmem>>, vector<1x128xf32>
    tpu.vector_store %arg4[%c0_99, %c0_100], %188 {strides = array<i32>} : memref<2x128xf32, #tpu.memory_space<vmem>>, vector<1x128xf32>,
    %190 = vector.extract_strided_slice %178 {offsets = [0, 128], sizes = [1, 128], strides = [1, 1]} : vector<1x256xf32> to vector<1x128xf32>
    %cst_101 = arith.constant dense<0.000000e+00> : vector<1x128xf32>
    %191 = tpu.matmul %190, %179, %cst_101 {dimension_numbers = #tpu.dot_dimension_numbers<[1], [0], [0], [1], [0, 0, 1, 1], [], []>} : vector<1x128xf32>, vector<128x128xf32>, vector<1x128xf32> -> vector<1x128xf32>
    %192 = arith.addf %191, %180 : vector<1x128xf32>
    %193 = arith.negf %192 : vector<1x128xf32>
    %194 = math.exp %193 : vector<1x128xf32>
    %cst_102 = arith.constant 1.000000e+00 : f32
    %195 = vector.broadcast %cst_102 : f32 to vector<1x128xf32>
    %196 = arith.addf %195, %194 : vector<1x128xf32>
    %197 = arith.divf %195, %196 : vector<1x128xf32>
    %c1_103 = arith.constant 1 : index
    %c0_104 = arith.constant 0 : index
    %198 = vector.load %arg4[%c1_103, %c0_104] : memref<2x128xf32, #tpu.memory_space<vmem>>, vector<1x128xf32>
    tpu.vector_store %arg4[%c1_103, %c0_104], %197 {strides = array<i32>} : memref<2x128xf32, #tpu.memory_space<vmem>>, vector<1x128xf32>,
    return
  }
}

</mosaic_0001>

<llo_original>
// kernel: multi_temporal_conv_net.1
$region0: #{multi_temporal_conv_net.1}
  #allocation0 [shape = 'u32[]', space=smem, size = 0x4, offset = 0x4, fixed_abs, tag = 'smem constant byte address 0x4 - core index']
  #allocation1 [shape = 'u32[144,128]{1,0:T(1,128)}', space=vmem, size = 0x12000, scoped, tag = 'internal scratch']
  %s0 = inlined_call_operand.vmem [shape: f32[16,256], index: 0, kind: input, shape index: {}]
  %s1 = inlined_call_operand.vmem [shape: f32[19,16,16], index: 1, kind: input, shape index: {}]
  %s2 = inlined_call_operand.vmem [shape: f32[128,128], index: 2, kind: input, shape index: {}]
  %s3 = inlined_call_operand.vmem [shape: f32[1,128], index: 3, kind: input, shape index: {}]
  %s4 = inlined_call_operand.hbm [shape: f32[2,128], index: 4, kind: output, shape index: {}]
  %s5 = sld [smem:[#allocation0]]
  $region26: #{multi_temporal_conv_net.1} parent=0
    _
  %s7 = ssub.s32 1, %s5
  %s8 = scalar_select 0, %s7, %s5
  $region1: #{multi_temporal_conv_net.1} parent=0
    #allocation2 [shape = 'u8[1024]{0}', space=vmem, size = 0x400, scoped, tag = 'output window, operand 0, single buffered']
    #allocation3 [shape = 's32[1]{0}', space=sflag, size = 0x4, scoped, tag = 'scoped memory for multi_temporal_conv_net.1']
    %9 = vsyncpa [#allocation3], 0
    // Predicated region
    $region2: #{multi_temporal_conv_net.1} parent=1 // pred_check
      _
    $region3: #{multi_temporal_conv_net.1} parent=1 // pred_check_branch
      %11 = sbr.rel (0) target = $region5
    $region4: #{multi_temporal_conv_net.1} parent=1 // pred_region
      _
    $region5: #{multi_temporal_conv_net.1} parent=1 // pred_fallthru
      _
    // Predicated region
    $region6: #{multi_temporal_conv_net.1} parent=1 // pred_check
      _
    $region7: #{multi_temporal_conv_net.1} parent=1 // pred_check_branch
      %13 = sbr.rel (0) target = $region9
    $region8: #{multi_temporal_conv_net.1} parent=1 // pred_region
      _
    $region9: #{multi_temporal_conv_net.1} parent=1 // pred_fallthru
      _
    // Predicated region
    $region10: #{multi_temporal_conv_net.1} parent=1 // pred_check
      _
    $region11: #{multi_temporal_conv_net.1} parent=1 // pred_check_branch
      %15 = sbr.rel (0) target = $region13
    $region12: #{multi_temporal_conv_net.1} parent=1 // pred_region
      _
    $region13: #{multi_temporal_conv_net.1} parent=1 // pred_fallthru
      _
    // Predicated region
    $region14: #{multi_temporal_conv_net.1} parent=1 // pred_check
      _
    $region15: #{multi_temporal_conv_net.1} parent=1 // pred_check_branch
      %17 = sbr.rel (0) target = $region17
    $region16: #{multi_temporal_conv_net.1} parent=1 // pred_region
      _
    $region17: #{multi_temporal_conv_net.1} parent=1 // pred_fallthru
      _
    %v18 = vld [vmem:[%s0] sm:$0xff]
    %v19 = vld [vmem:[%s0 + $0x8] sm:$0xff]
    %v20 = vld [vmem:[%s0 + $0x10] sm:$0xff]
    %v21 = vld [vmem:[%s0 + $0x18] sm:$0xff]
    %v22 = vlaneseq
    %v23 = vand.u32 %v22, 127
    %v24 = vadd.s32 %v23, 128
    %vm25 = vcmp.lt.s32.totalorder %v23, 0
    %v26 = vsub.s32 0, %v23
    %v27 = vsel %vm25, %v26, %v23
    %v28 = vshrl.u32 %v27, 7
    %v29 = vand.u32 %v27, 127
    %v30 = vsub.s32 0, %v29
    %v31 = vsel %vm25, %v30, %v29
    %vm32 = vcmp.lt.s32.totalorder %v24, 0
    %v33 = vsub.s32 0, %v24
    %v34 = vsel %vm32, %v33, %v24
    %v35 = vshrl.u32 %v34, 7
    %v36 = vand.u32 %v34, 127
    %v37 = vsub.s32 0, %v36
    %v38 = vsel %vm32, %v37, %v36
    %vm39 = vcmp.ne.s32.totalorder %v31, 0
    %vm40 = vcmp.ne.s32.totalorder %v38, 0
    %vm41 = vcmp.lt.s32.totalorder %v31, 0
    %vm42 = vcmp.lt.s32.totalorder %v38, 0
    %vm43 = vmand %vm41, %vm39
    %vm44 = vmand %vm42, %vm40
    %v45 = vadd.s32 %v31, 128
    %v46 = vadd.s32 %v38, 128
    %v47 = vsel %vm43, %v45, %v31
    %v48 = vsel %vm44, %v46, %v38
    %v49 = vlaneseq
    %v50 = vshrl.u32 %v49, 7
    %v51 = vadd.s32 %v50, 8
    %vm52 = vcmp.lt.s32.totalorder %v50, 3
    %vm53 = vcmp.lt.s32.totalorder %v51, 3
    %vm54 = vcmp.ge.s32.totalorder %v47, 1
    %vm55 = vcmp.ge.s32.totalorder %v48, 1
    %vm56 = vmand %vm52, %vm54
    %vm57 = vmand %vm52, %vm55
    %vm58 = vmand %vm53, %vm54
    %vm59 = vmand %vm53, %vm55
    %v60 = vsel %vm56, 1, 0
    %v61 = vsel %vm57, 1, 0
    %v62 = vsel %vm58, 1, 0
    %v63 = vsel %vm59, 1, 0
    %v64 = vcvt.s32.f32 %v60
    %v65 = vcvt.s32.f32 %v61
    %v66 = vcvt.s32.f32 %v62
    %v67 = vcvt.s32.f32 %v63
    %vm68 = vcmp.ge.s32.totalorder %v50, 3
    %vm69 = vcmp.ge.s32.totalorder %v51, 3
    %vm70 = vcmp.lt.s32.totalorder %v50, 6
    %vm71 = vcmp.lt.s32.totalorder %v51, 6
    %vm72 = vmand %vm68, %vm70
    %vm73 = vmand %vm69, %vm71
    %vm74 = vcmp.ge.s32.totalorder %v47, 2
    %vm75 = vcmp.ge.s32.totalorder %v48, 2
    %vm76 = vmand %vm72, %vm74
    %vm77 = vmand %vm72, %vm75
    %vm78 = vmand %vm73, %vm74
    %vm79 = vmand %vm73, %vm75
    %v80 = vsel %vm76, 1, 0
    %v81 = vsel %vm77, 1, 0
    %v82 = vsel %vm78, 1, 0
    %v83 = vsel %vm79, 1, 0
    %v84 = vcvt.s32.f32 %v80
    %v85 = vcvt.s32.f32 %v81
    %v86 = vcvt.s32.f32 %v82
    %v87 = vcvt.s32.f32 %v83
    %vm88 = vcmp.ge.s32.totalorder %v50, 6
    %vm89 = vcmp.ge.s32.totalorder %v51, 6
    %vm90 = vcmp.lt.s32.totalorder %v50, 9
    %vm91 = vcmp.lt.s32.totalorder %v51, 9
    %vm92 = vmand %vm88, %vm90
    %vm93 = vmand %vm89, %vm91
    %vm94 = vcmp.ge.s32.totalorder %v47, 4
    %vm95 = vcmp.ge.s32.totalorder %v48, 4
    %vm96 = vmand %vm92, %vm94
    %vm97 = vmand %vm92, %vm95
    %vm98 = vmand %vm93, %vm94
    %vm99 = vmand %vm93, %vm95
    %v100 = vsel %vm96, 1, 0
    %v101 = vsel %vm97, 1, 0
    %v102 = vsel %vm98, 1, 0
    %v103 = vsel %vm99, 1, 0
    %v104 = vcvt.s32.f32 %v100
    %v105 = vcvt.s32.f32 %v101
    %v106 = vcvt.s32.f32 %v102
    %v107 = vcvt.s32.f32 %v103
    %v108 = vsel %vm54, 1, 0
    %v109 = vsel %vm55, 1, 0
    %v110 = vcvt.s32.f32 %v108
    %v111 = vcvt.s32.f32 %v109
    %s112 = scalar_lea.vmem %s1, 16
    %v113 = vld [vmem:[%s112] sm:$0xff]
    %v114 = vld [vmem:[%s112 + $0x8] sm:$0xff]
    %vm115 = vcmask 130048
    %v117 = vsel %vm115, %v113, 0
    %v120 = vsel %vm115, %v114, 0
    %122 = vmatprep.subr.mxu0 %v19
    %123 = vmatpush1.msra.mxu0 %v18
    %124 = vmatprep.subr.mxu0 %v21
    %125 = vmatpush1.msra.mxu0 %v20
    %126 = vmatprep.subr.mxu0 0.0
    %127 = vmatpush1.msra.mxu0 0.0
    %128 = vmatprep.subr.mxu0 0.0
    %129 = vmatpush1.msra.mxu0 0.0
    %130 = vmatprep.subr.mxu0 0.0
    %131 = vmatpush1.msra.mxu0 0.0
    %132 = vmatprep.subr.mxu0 0.0
    %133 = vmatpush1.msra.mxu0 0.0
    %134 = vmatprep.subr.mxu0 0.0
    %135 = vmatpush1.msra.mxu0 0.0
    %136 = vmatprep.subr.mxu0 0.0
    %137 = vmatpush1.msra.mxu0 0.0
    %138 = vmatprep.subr.mxu0 0.0
    %139 = vmatpush1.msra.mxu0 0.0
    %140 = vmatprep.subr.mxu0 0.0
    %141 = vmatpush1.msra.mxu0 0.0
    %142 = vmatprep.subr.mxu0 0.0
    %143 = vmatpush1.msra.mxu0 0.0
    %144 = vmatprep.subr.mxu0 0.0
    %145 = vmatpush1.msra.mxu0 0.0
    %146 = vmatprep.subr.mxu0 0.0
    %147 = vmatpush1.msra.mxu0 0.0
    %148 = vmatprep.subr.mxu0 0.0
    %149 = vmatpush1.msra.mxu0 0.0
    %150 = vmatprep.subr.mxu0 0.0
    %151 = vmatpush1.msra.mxu0 0.0
    %152 = vmatprep.subr.mxu0 0.0
    %153 = vmatpush1.msra.mxu0 0.0
    %154 = vmatprep.subr.mxu0 0.0
    %155 = vmatpush1.msra.mxu0 0.0
    %156 = vmatprep.subr.mxu0 0.0
    %157 = vmatpush1.msra.mxu0 0.0
    %158 = vmatprep.subr.mxu0 0.0
    %159 = vmatpush1.msra.mxu0 0.0
    %160 = vmatprep.subr.mxu0 0.0
    %161 = vmatpush1.msra.mxu0 0.0
    %162 = vmatprep.subr.mxu0 0.0
    %163 = vmatpush1.msra.mxu0 0.0
    %164 = vmatprep.subr.mxu0 0.0
    %165 = vmatpush1.msra.mxu0 0.0
    %166 = vmatprep.subr.mxu0 0.0
    %167 = vmatpush1.msra.mxu0 0.0
    %168 = vmatprep.subr.mxu0 0.0
    %169 = vmatpush1.msra.mxu0 0.0
    %170 = vmatprep.subr.mxu0 0.0
    %171 = vmatpush1.msra.mxu0 0.0
    %172 = vmatprep.subr.mxu0 0.0
    %173 = vmatpush1.msra.mxu0 0.0
    %174 = vmatprep.subr.mxu0 0.0
    %175 = vmatpush1.msra.mxu0 0.0
    %176 = vmatprep.subr.mxu0 0.0
    %177 = vmatpush1.msra.mxu0 0.0
    %178 = vmatprep.subr.mxu0 0.0
    %179 = vmatpush1.msra.mxu0 0.0
    %180 = vmatprep.subr.mxu0 0.0
    %181 = vmatpush1.msra.mxu0 0.0
    %182 = vmatprep.subr.mxu0 0.0
    %183 = vmatpush1.msra.mxu0 0.0
    %184 = vmatprep.subr.mxu0 0.0
    %185 = vmatpush1.msra.mxu0 0.0
    %186 = vmatprep.mubr.f32.mxu0 0.0
    %187 = vmatmul.mubr.f32.gmra.mrb[0].mxu0 %v117
    %v188 = vpop.f32.mrb[0].mxu0
    %v189 = vadd.f32 0.0, %v188
    %v190 = vpop.f32.mrb[0].mxu0
    %v191 = vadd.f32 0.0, %v190
    %192 = vmatprep.mubr.f32.mxu0 0.0
    %193 = vmatmul.mubr.f32.gmra.mrb[0].mxu0 %v120
    %v194 = vpop.f32.mrb[0].mxu0
    %v195 = vadd.f32 0.0, %v194
    %v196 = vpop.f32.mrb[0].mxu0
    %v197 = vadd.f32 0.0, %v196
    %198 = vdwg.mxu0
    %199 = vrot.lane.b32.xlu0 %v189, 1
    %v200 = vpop.permute.xlu0 %199
    %201 = vrot.lane.b32.xlu0 %v195, 1
    %v202 = vpop.permute.xlu0 %201
    %203 = vrot.lane.b32.xlu0 %v191, 1
    %v204 = vpop.permute.xlu0 %203
    %205 = vrot.lane.b32.xlu0 %v197, 1
    %v206 = vpop.permute.xlu0 %205
    %vm207 = vcmp.lt.s32.totalorder %v23, 1
    %v208 = vsel %vm207, %v200, %v204
    %v209 = vsel %vm207, %v202, %v206
    %v210 = vsel %vm207, %v204, %v200
    %v211 = vsel %vm207, %v206, %v202
    %v212 = vmul.f32 %v210, %v64
    %v213 = vmul.f32 %v208, %v65
    %v214 = vmul.f32 %v211, %v66
    %v215 = vmul.f32 %v209, %v67
    %216 = vrot.lane.b32.xlu0 %v189, 2
    %v217 = vpop.permute.xlu0 %216
    %218 = vrot.lane.b32.xlu0 %v195, 2
    %v219 = vpop.permute.xlu0 %218
    %220 = vrot.lane.b32.xlu0 %v191, 2
    %v221 = vpop.permute.xlu0 %220
    %222 = vrot.lane.b32.xlu0 %v197, 2
    %v223 = vpop.permute.xlu0 %222
    %vm224 = vcmp.lt.s32.totalorder %v23, 2
    %v225 = vsel %vm224, %v217, %v221
    %v226 = vsel %vm224, %v219, %v223
    %v227 = vsel %vm224, %v221, %v217
    %v228 = vsel %vm224, %v223, %v219
    %v229 = vmul.f32 %v227, %v84
    %v230 = vmul.f32 %v225, %v85
    %v231 = vmul.f32 %v228, %v86
    %v232 = vmul.f32 %v226, %v87
    %v233 = vadd.f32 %v212, %v229
    %v234 = vadd.f32 %v213, %v230
    %v235 = vadd.f32 %v214, %v231
    %v236 = vadd.f32 %v215, %v232
    %237 = vrot.lane.b32.xlu0 %v189, 4
    %v238 = vpop.permute.xlu0 %237
    %239 = vrot.lane.b32.xlu0 %v195, 4
    %v240 = vpop.permute.xlu0 %239
    %241 = vrot.lane.b32.xlu0 %v191, 4
    %v242 = vpop.permute.xlu0 %241
    %243 = vrot.lane.b32.xlu0 %v197, 4
    %v244 = vpop.permute.xlu0 %243
    %vm245 = vcmp.lt.s32.totalorder %v23, 4
    %v246 = vsel %vm245, %v238, %v242
    %v247 = vsel %vm245, %v240, %v244
    %v248 = vsel %vm245, %v242, %v238
    %v249 = vsel %vm245, %v244, %v240
    %v250 = vmul.f32 %v248, %v104
    %v251 = vmul.f32 %v246, %v105
    %v252 = vmul.f32 %v249, %v106
    %v253 = vmul.f32 %v247, %v107
    %v254 = vadd.f32 %v233, %v250
    %v255 = vadd.f32 %v234, %v251
    %v256 = vadd.f32 %v235, %v252
    %v257 = vadd.f32 %v236, %v253
    %s258 = scalar_lea.vmem %s1, 32
    %v259 = vld [vmem:[%s258] sm:$0xff]
    %v260 = vld [vmem:[%s258 + $0x8] sm:$0xff]
    %v262 = vsel %vm115, %v259, 0
    %v265 = vsel %vm115, %v260, 0
    %267 = vmatprep.subr.mxu0 %v19
    %268 = vmatpush1.msra.mxu0 %v18
    %269 = vmatprep.subr.mxu0 %v21
    %270 = vmatpush1.msra.mxu0 %v20
    %271 = vmatprep.subr.mxu0 0.0
    %272 = vmatpush1.msra.mxu0 0.0
    %273 = vmatprep.subr.mxu0 0.0
    %274 = vmatpush1.msra.mxu0 0.0
    %275 = vmatprep.subr.mxu0 0.0
    %276 = vmatpush1.msra.mxu0 0.0
    %277 = vmatprep.subr.mxu0 0.0
    %278 = vmatpush1.msra.mxu0 0.0
    %279 = vmatprep.subr.mxu0 0.0
    %280 = vmatpush1.msra.mxu0 0.0
    %281 = vmatprep.subr.mxu0 0.0
    %282 = vmatpush1.msra.mxu0 0.0
    %283 = vmatprep.subr.mxu0 0.0
    %284 = vmatpush1.msra.mxu0 0.0
    %285 = vmatprep.subr.mxu0 0.0
    %286 = vmatpush1.msra.mxu0 0.0
    %287 = vmatprep.subr.mxu0 0.0
    %288 = vmatpush1.msra.mxu0 0.0
    %289 = vmatprep.subr.mxu0 0.0
    %290 = vmatpush1.msra.mxu0 0.0
    %291 = vmatprep.subr.mxu0 0.0
    %292 = vmatpush1.msra.mxu0 0.0
    %293 = vmatprep.subr.mxu0 0.0
    %294 = vmatpush1.msra.mxu0 0.0
    %295 = vmatprep.subr.mxu0 0.0
    %296 = vmatpush1.msra.mxu0 0.0
    %297 = vmatprep.subr.mxu0 0.0
    %298 = vmatpush1.msra.mxu0 0.0
    %299 = vmatprep.subr.mxu0 0.0
    %300 = vmatpush1.msra.mxu0 0.0
    %301 = vmatprep.subr.mxu0 0.0
    %302 = vmatpush1.msra.mxu0 0.0
    %303 = vmatprep.subr.mxu0 0.0
    %304 = vmatpush1.msra.mxu0 0.0
    %305 = vmatprep.subr.mxu0 0.0
    %306 = vmatpush1.msra.mxu0 0.0
    %307 = vmatprep.subr.mxu0 0.0
    %308 = vmatpush1.msra.mxu0 0.0
    %309 = vmatprep.subr.mxu0 0.0
    %310 = vmatpush1.msra.mxu0 0.0
    %311 = vmatprep.subr.mxu0 0.0
    %312 = vmatpush1.msra.mxu0 0.0
    %313 = vmatprep.subr.mxu0 0.0
    %314 = vmatpush1.msra.mxu0 0.0
    %315 = vmatprep.subr.mxu0 0.0
    %316 = vmatpush1.msra.mxu0 0.0
    %317 = vmatprep.subr.mxu0 0.0
    %318 = vmatpush1.msra.mxu0 0.0
    %319 = vmatprep.subr.mxu0 0.0
    %320 = vmatpush1.msra.mxu0 0.0
    %321 = vmatprep.subr.mxu0 0.0
    %322 = vmatpush1.msra.mxu0 0.0
    %323 = vmatprep.subr.mxu0 0.0
    %324 = vmatpush1.msra.mxu0 0.0
    %325 = vmatprep.subr.mxu0 0.0
    %326 = vmatpush1.msra.mxu0 0.0
    %327 = vmatprep.subr.mxu0 0.0
    %328 = vmatpush1.msra.mxu0 0.0
    %329 = vmatprep.subr.mxu0 0.0
    %330 = vmatpush1.msra.mxu0 0.0
    %331 = vmatprep.mubr.f32.mxu0 0.0
    %332 = vmatmul.mubr.f32.gmra.mrb[0].mxu0 %v262
    %v333 = vpop.f32.mrb[0].mxu0
    %v334 = vadd.f32 0.0, %v333
    %v335 = vpop.f32.mrb[0].mxu0
    %v336 = vadd.f32 0.0, %v335
    %337 = vmatprep.mubr.f32.mxu0 0.0
    %338 = vmatmul.mubr.f32.gmra.mrb[0].mxu0 %v265
    %v339 = vpop.f32.mrb[0].mxu0
    %v340 = vadd.f32 0.0, %v339
    %v341 = vpop.f32.mrb[0].mxu0
    %v342 = vadd.f32 0.0, %v341
    %343 = vdwg.mxu0
    %v344 = vadd.f32 %v254, %v334
    %v345 = vadd.f32 %v255, %v336
    %v346 = vadd.f32 %v256, %v340
    %v347 = vadd.f32 %v257, %v342
    %v348 = vmax.f32 %v344, 0.0
    %v349 = vmax.f32 %v345, 0.0
    %v350 = vmax.f32 %v346, 0.0
    %v351 = vmax.f32 %v347, 0.0
    %s352 = scalar_lea.vmem %s1, 48
    %v353 = vld [vmem:[%s352] sm:$0xff]
    %v354 = vld [vmem:[%s352 + $0x8] sm:$0xff]
    %v356 = vsel %vm115, %v353, 0
    %v359 = vsel %vm115, %v354, 0
    %361 = vmatprep.subr.mxu0 %v349
    %362 = vmatpush1.msra.mxu0 %v348
    %363 = vmatprep.subr.mxu0 %v351
    %364 = vmatpush1.msra.mxu0 %v350
    %365 = vmatprep.subr.mxu0 0.0
    %366 = vmatpush1.msra.mxu0 0.0
    %367 = vmatprep.subr.mxu0 0.0
    %368 = vmatpush1.msra.mxu0 0.0
    %369 = vmatprep.subr.mxu0 0.0
    %370 = vmatpush1.msra.mxu0 0.0
    %371 = vmatprep.subr.mxu0 0.0
    %372 = vmatpush1.msra.mxu0 0.0
    %373 = vmatprep.subr.mxu0 0.0
    %374 = vmatpush1.msra.mxu0 0.0
    %375 = vmatprep.subr.mxu0 0.0
    %376 = vmatpush1.msra.mxu0 0.0
    %377 = vmatprep.subr.mxu0 0.0
    %378 = vmatpush1.msra.mxu0 0.0
    %379 = vmatprep.subr.mxu0 0.0
    %380 = vmatpush1.msra.mxu0 0.0
    %381 = vmatprep.subr.mxu0 0.0
    %382 = vmatpush1.msra.mxu0 0.0
    %383 = vmatprep.subr.mxu0 0.0
    %384 = vmatpush1.msra.mxu0 0.0
    %385 = vmatprep.subr.mxu0 0.0
    %386 = vmatpush1.msra.mxu0 0.0
    %387 = vmatprep.subr.mxu0 0.0
    %388 = vmatpush1.msra.mxu0 0.0
    %389 = vmatprep.subr.mxu0 0.0
    %390 = vmatpush1.msra.mxu0 0.0
    %391 = vmatprep.subr.mxu0 0.0
    %392 = vmatpush1.msra.mxu0 0.0
    %393 = vmatprep.subr.mxu0 0.0
    %394 = vmatpush1.msra.mxu0 0.0
    %395 = vmatprep.subr.mxu0 0.0
    %396 = vmatpush1.msra.mxu0 0.0
    %397 = vmatprep.subr.mxu0 0.0
    %398 = vmatpush1.msra.mxu0 0.0
    %399 = vmatprep.subr.mxu0 0.0
    %400 = vmatpush1.msra.mxu0 0.0
    %401 = vmatprep.subr.mxu0 0.0
    %402 = vmatpush1.msra.mxu0 0.0
    %403 = vmatprep.subr.mxu0 0.0
    %404 = vmatpush1.msra.mxu0 0.0
    %405 = vmatprep.subr.mxu0 0.0
    %406 = vmatpush1.msra.mxu0 0.0
    %407 = vmatprep.subr.mxu0 0.0
    %408 = vmatpush1.msra.mxu0 0.0
    %409 = vmatprep.subr.mxu0 0.0
    %410 = vmatpush1.msra.mxu0 0.0
    %411 = vmatprep.subr.mxu0 0.0
    %412 = vmatpush1.msra.mxu0 0.0
    %413 = vmatprep.subr.mxu0 0.0
    %414 = vmatpush1.msra.mxu0 0.0
    %415 = vmatprep.subr.mxu0 0.0
    %416 = vmatpush1.msra.mxu0 0.0
    %417 = vmatprep.subr.mxu0 0.0
    %418 = vmatpush1.msra.mxu0 0.0
    %419 = vmatprep.subr.mxu0 0.0
    %420 = vmatpush1.msra.mxu0 0.0
    %421 = vmatprep.subr.mxu0 0.0
    %422 = vmatpush1.msra.mxu0 0.0
    %423 = vmatprep.subr.mxu0 0.0
    %424 = vmatpush1.msra.mxu0 0.0
    %425 = vmatprep.mubr.f32.mxu0 0.0
    %426 = vmatmul.mubr.f32.gmra.mrb[0].mxu0 %v356
    %v427 = vpop.f32.mrb[0].mxu0
    %v428 = vadd.f32 0.0, %v427
    %v429 = vpop.f32.mrb[0].mxu0
    %v430 = vadd.f32 0.0, %v429
    %431 = vmatprep.mubr.f32.mxu0 0.0
    %432 = vmatmul.mubr.f32.gmra.mrb[0].mxu0 %v359
    %v433 = vpop.f32.mrb[0].mxu0
    %v434 = vadd.f32 0.0, %v433
    %v435 = vpop.f32.mrb[0].mxu0
    %v436 = vadd.f32 0.0, %v435
    %437 = vdwg.mxu0
    %438 = vrot.lane.b32.xlu0 %v428, 1
    %v439 = vpop.permute.xlu0 %438
    %440 = vrot.lane.b32.xlu0 %v434, 1
    %v441 = vpop.permute.xlu0 %440
    %442 = vrot.lane.b32.xlu0 %v430, 1
    %v443 = vpop.permute.xlu0 %442
    %444 = vrot.lane.b32.xlu0 %v436, 1
    %v445 = vpop.permute.xlu0 %444
    %v446 = vsel %vm207, %v439, %v443
    %v447 = vsel %vm207, %v441, %v445
    %v448 = vsel %vm207, %v443, %v439
    %v449 = vsel %vm207, %v445, %v441
    %v450 = vmul.f32 %v448, %v64
    %v451 = vmul.f32 %v446, %v65
    %v452 = vmul.f32 %v449, %v66
    %v453 = vmul.f32 %v447, %v67
    %454 = vrot.lane.b32.xlu0 %v428, 2
    %v455 = vpop.permute.xlu0 %454
    %456 = vrot.lane.b32.xlu0 %v434, 2
    %v457 = vpop.permute.xlu0 %456
    %458 = vrot.lane.b32.xlu0 %v430, 2
    %v459 = vpop.permute.xlu0 %458
    %460 = vrot.lane.b32.xlu0 %v436, 2
    %v461 = vpop.permute.xlu0 %460
    %v462 = vsel %vm224, %v455, %v459
    %v463 = vsel %vm224, %v457, %v461
    %v464 = vsel %vm224, %v459, %v455
    %v465 = vsel %vm224, %v461, %v457
    %v466 = vmul.f32 %v464, %v84
    %v467 = vmul.f32 %v462, %v85
    %v468 = vmul.f32 %v465, %v86
    %v469 = vmul.f32 %v463, %v87
    %v470 = vadd.f32 %v450, %v466
    %v471 = vadd.f32 %v451, %v467
    %v472 = vadd.f32 %v452, %v468
    %v473 = vadd.f32 %v453, %v469
    %474 = vrot.lane.b32.xlu0 %v428, 4
    %v475 = vpop.permute.xlu0 %474
    %476 = vrot.lane.b32.xlu0 %v434, 4
    %v477 = vpop.permute.xlu0 %476
    %478 = vrot.lane.b32.xlu0 %v430, 4
    %v479 = vpop.permute.xlu0 %478
    %480 = vrot.lane.b32.xlu0 %v436, 4
    %v481 = vpop.permute.xlu0 %480
    %v482 = vsel %vm245, %v475, %v479
    %v483 = vsel %vm245, %v477, %v481
    %v484 = vsel %vm245, %v479, %v475
    %v485 = vsel %vm245, %v481, %v477
    %v486 = vmul.f32 %v484, %v104
    %v487 = vmul.f32 %v482, %v105
    %v488 = vmul.f32 %v485, %v106
    %v489 = vmul.f32 %v483, %v107
    %v490 = vadd.f32 %v470, %v486
    %v491 = vadd.f32 %v471, %v487
    %v492 = vadd.f32 %v472, %v488
    %v493 = vadd.f32 %v473, %v489
    %s494 = scalar_lea.vmem %s1, 64
    %v495 = vld [vmem:[%s494] sm:$0xff]
    %v496 = vld [vmem:[%s494 + $0x8] sm:$0xff]
    %v498 = vsel %vm115, %v495, 0
    %v501 = vsel %vm115, %v496, 0
    %503 = vmatprep.subr.mxu0 %v349
    %504 = vmatpush1.msra.mxu0 %v348
    %505 = vmatprep.subr.mxu0 %v351
    %506 = vmatpush1.msra.mxu0 %v350
    %507 = vmatprep.subr.mxu0 0.0
    %508 = vmatpush1.msra.mxu0 0.0
    %509 = vmatprep.subr.mxu0 0.0
    %510 = vmatpush1.msra.mxu0 0.0
    %511 = vmatprep.subr.mxu0 0.0
    %512 = vmatpush1.msra.mxu0 0.0
    %513 = vmatprep.subr.mxu0 0.0
    %514 = vmatpush1.msra.mxu0 0.0
    %515 = vmatprep.subr.mxu0 0.0
    %516 = vmatpush1.msra.mxu0 0.0
    %517 = vmatprep.subr.mxu0 0.0
    %518 = vmatpush1.msra.mxu0 0.0
    %519 = vmatprep.subr.mxu0 0.0
    %520 = vmatpush1.msra.mxu0 0.0
    %521 = vmatprep.subr.mxu0 0.0
    %522 = vmatpush1.msra.mxu0 0.0
    %523 = vmatprep.subr.mxu0 0.0
    %524 = vmatpush1.msra.mxu0 0.0
    %525 = vmatprep.subr.mxu0 0.0
    %526 = vmatpush1.msra.mxu0 0.0
    %527 = vmatprep.subr.mxu0 0.0
    %528 = vmatpush1.msra.mxu0 0.0
    %529 = vmatprep.subr.mxu0 0.0
    %530 = vmatpush1.msra.mxu0 0.0
    %531 = vmatprep.subr.mxu0 0.0
    %532 = vmatpush1.msra.mxu0 0.0
    %533 = vmatprep.subr.mxu0 0.0
    %534 = vmatpush1.msra.mxu0 0.0
    %535 = vmatprep.subr.mxu0 0.0
    %536 = vmatpush1.msra.mxu0 0.0
    %537 = vmatprep.subr.mxu0 0.0
    %538 = vmatpush1.msra.mxu0 0.0
    %539 = vmatprep.subr.mxu0 0.0
    %540 = vmatpush1.msra.mxu0 0.0
    %541 = vmatprep.subr.mxu0 0.0
    %542 = vmatpush1.msra.mxu0 0.0
    %543 = vmatprep.subr.mxu0 0.0
    %544 = vmatpush1.msra.mxu0 0.0
    %545 = vmatprep.subr.mxu0 0.0
    %546 = vmatpush1.msra.mxu0 0.0
    %547 = vmatprep.subr.mxu0 0.0
    %548 = vmatpush1.msra.mxu0 0.0
    %549 = vmatprep.subr.mxu0 0.0
    %550 = vmatpush1.msra.mxu0 0.0
    %551 = vmatprep.subr.mxu0 0.0
    %552 = vmatpush1.msra.mxu0 0.0
    %553 = vmatprep.subr.mxu0 0.0
    %554 = vmatpush1.msra.mxu0 0.0
    %555 = vmatprep.subr.mxu0 0.0
    %556 = vmatpush1.msra.mxu0 0.0
    %557 = vmatprep.subr.mxu0 0.0
    %558 = vmatpush1.msra.mxu0 0.0
    %559 = vmatprep.subr.mxu0 0.0
    %560 = vmatpush1.msra.mxu0 0.0
    %561 = vmatprep.subr.mxu0 0.0
    %562 = vmatpush1.msra.mxu0 0.0
    %563 = vmatprep.subr.mxu0 0.0
    %564 = vmatpush1.msra.mxu0 0.0
    %565 = vmatprep.subr.mxu0 0.0
    %566 = vmatpush1.msra.mxu0 0.0
    %567 = vmatprep.mubr.f32.mxu0 0.0
    %568 = vmatmul.mubr.f32.gmra.mrb[0].mxu0 %v498
    %v569 = vpop.f32.mrb[0].mxu0
    %v570 = vadd.f32 0.0, %v569
    %v571 = vpop.f32.mrb[0].mxu0
    %v572 = vadd.f32 0.0, %v571
    %573 = vmatprep.mubr.f32.mxu0 0.0
    %574 = vmatmul.mubr.f32.gmra.mrb[0].mxu0 %v501
    %v575 = vpop.f32.mrb[0].mxu0
    %v576 = vadd.f32 0.0, %v575
    %v577 = vpop.f32.mrb[0].mxu0
    %v578 = vadd.f32 0.0, %v577
    %579 = vdwg.mxu0
    %v580 = vadd.f32 %v490, %v570
    %v581 = vadd.f32 %v491, %v572
    %v582 = vadd.f32 %v492, %v576
    %v583 = vadd.f32 %v493, %v578
    %v584 = vmax.f32 %v580, 0.0
    %v585 = vmax.f32 %v581, 0.0
    %v586 = vmax.f32 %v582, 0.0
    %v587 = vmax.f32 %v583, 0.0
    %v588 = vld [vmem:[%s1] sm:$0xff]
    %v589 = vld [vmem:[%s1 + $0x8] sm:$0xff]
    %v591 = vsel %vm115, %v588, 0
    %v594 = vsel %vm115, %v589, 0
    %596 = vmatprep.subr.mxu0 %v19
    %597 = vmatpush1.msra.mxu0 %v18
    %598 = vmatprep.subr.mxu0 %v21
    %599 = vmatpush1.msra.mxu0 %v20
    %600 = vmatprep.subr.mxu0 0.0
    %601 = vmatpush1.msra.mxu0 0.0
    %602 = vmatprep.subr.mxu0 0.0
    %603 = vmatpush1.msra.mxu0 0.0
    %604 = vmatprep.subr.mxu0 0.0
    %605 = vmatpush1.msra.mxu0 0.0
    %606 = vmatprep.subr.mxu0 0.0
    %607 = vmatpush1.msra.mxu0 0.0
    %608 = vmatprep.subr.mxu0 0.0
    %609 = vmatpush1.msra.mxu0 0.0
    %610 = vmatprep.subr.mxu0 0.0
    %611 = vmatpush1.msra.mxu0 0.0
    %612 = vmatprep.subr.mxu0 0.0
    %613 = vmatpush1.msra.mxu0 0.0
    %614 = vmatprep.subr.mxu0 0.0
    %615 = vmatpush1.msra.mxu0 0.0
    %616 = vmatprep.subr.mxu0 0.0
    %617 = vmatpush1.msra.mxu0 0.0
    %618 = vmatprep.subr.mxu0 0.0
    %619 = vmatpush1.msra.mxu0 0.0
    %620 = vmatprep.subr.mxu0 0.0
    %621 = vmatpush1.msra.mxu0 0.0
    %622 = vmatprep.subr.mxu0 0.0
    %623 = vmatpush1.msra.mxu0 0.0
    %624 = vmatprep.subr.mxu0 0.0
    %625 = vmatpush1.msra.mxu0 0.0
    %626 = vmatprep.subr.mxu0 0.0
    %627 = vmatpush1.msra.mxu0 0.0
    %628 = vmatprep.subr.mxu0 0.0
    %629 = vmatpush1.msra.mxu0 0.0
    %630 = vmatprep.subr.mxu0 0.0
    %631 = vmatpush1.msra.mxu0 0.0
    %632 = vmatprep.subr.mxu0 0.0
    %633 = vmatpush1.msra.mxu0 0.0
    %634 = vmatprep.subr.mxu0 0.0
    %635 = vmatpush1.msra.mxu0 0.0
    %636 = vmatprep.subr.mxu0 0.0
    %637 = vmatpush1.msra.mxu0 0.0
    %638 = vmatprep.subr.mxu0 0.0
    %639 = vmatpush1.msra.mxu0 0.0
    %640 = vmatprep.subr.mxu0 0.0
    %641 = vmatpush1.msra.mxu0 0.0
    %642 = vmatprep.subr.mxu0 0.0
    %643 = vmatpush1.msra.mxu0 0.0
    %644 = vmatprep.subr.mxu0 0.0
    %645 = vmatpush1.msra.mxu0 0.0
    %646 = vmatprep.subr.mxu0 0.0
    %647 = vmatpush1.msra.mxu0 0.0
    %648 = vmatprep.subr.mxu0 0.0
    %649 = vmatpush1.msra.mxu0 0.0
    %650 = vmatprep.subr.mxu0 0.0
    %651 = vmatpush1.msra.mxu0 0.0
    %652 = vmatprep.subr.mxu0 0.0
    %653 = vmatpush1.msra.mxu0 0.0
    %654 = vmatprep.subr.mxu0 0.0
    %655 = vmatpush1.msra.mxu0 0.0
    %656 = vmatprep.subr.mxu0 0.0
    %657 = vmatpush1.msra.mxu0 0.0
    %658 = vmatprep.subr.mxu0 0.0
    %659 = vmatpush1.msra.mxu0 0.0
    %660 = vmatprep.mubr.f32.mxu0 0.0
    %661 = vmatmul.mubr.f32.gmra.mrb[0].mxu0 %v591
    %v662 = vpop.f32.mrb[0].mxu0
    %v663 = vadd.f32 0.0, %v662
    %v664 = vpop.f32.mrb[0].mxu0
    %v665 = vadd.f32 0.0, %v664
    %666 = vmatprep.mubr.f32.mxu0 0.0
    %667 = vmatmul.mubr.f32.gmra.mrb[0].mxu0 %v594
    %v668 = vpop.f32.mrb[0].mxu0
    %v669 = vadd.f32 0.0, %v668
    %v670 = vpop.f32.mrb[0].mxu0
    %v671 = vadd.f32 0.0, %v670
    %672 = vdwg.mxu0
    %v673 = vadd.f32 %v584, %v663
    %v674 = vadd.f32 %v585, %v665
    %v675 = vadd.f32 %v586, %v669
    %v676 = vadd.f32 %v587, %v671
    %s677 = scalar_lea.vmem %s1, 80
    %v678 = vld [vmem:[%s677] sm:$0xff]
    %v679 = vld [vmem:[%s677 + $0x8] sm:$0xff]
    %v681 = vsel %vm115, %v678, 0
    %v684 = vsel %vm115, %v679, 0
    %686 = vmatprep.subr.mxu0 %v674
    %687 = vmatpush1.msra.mxu0 %v673
    %688 = vmatprep.subr.mxu0 %v676
    %689 = vmatpush1.msra.mxu0 %v675
    %690 = vmatprep.subr.mxu0 0.0
    %691 = vmatpush1.msra.mxu0 0.0
    %692 = vmatprep.subr.mxu0 0.0
    %693 = vmatpush1.msra.mxu0 0.0
    %694 = vmatprep.subr.mxu0 0.0
    %695 = vmatpush1.msra.mxu0 0.0
    %696 = vmatprep.subr.mxu0 0.0
    %697 = vmatpush1.msra.mxu0 0.0
    %698 = vmatprep.subr.mxu0 0.0
    %699 = vmatpush1.msra.mxu0 0.0
    %700 = vmatprep.subr.mxu0 0.0
    %701 = vmatpush1.msra.mxu0 0.0
    %702 = vmatprep.subr.mxu0 0.0
    %703 = vmatpush1.msra.mxu0 0.0
    %704 = vmatprep.subr.mxu0 0.0
    %705 = vmatpush1.msra.mxu0 0.0
    %706 = vmatprep.subr.mxu0 0.0
    %707 = vmatpush1.msra.mxu0 0.0
    %708 = vmatprep.subr.mxu0 0.0
    %709 = vmatpush1.msra.mxu0 0.0
    %710 = vmatprep.subr.mxu0 0.0
    %711 = vmatpush1.msra.mxu0 0.0
    %712 = vmatprep.subr.mxu0 0.0
    %713 = vmatpush1.msra.mxu0 0.0
    %714 = vmatprep.subr.mxu0 0.0
    %715 = vmatpush1.msra.mxu0 0.0
    %716 = vmatprep.subr.mxu0 0.0
    %717 = vmatpush1.msra.mxu0 0.0
    %718 = vmatprep.subr.mxu0 0.0
    %719 = vmatpush1.msra.mxu0 0.0
    %720 = vmatprep.subr.mxu0 0.0
    %721 = vmatpush1.msra.mxu0 0.0
    %722 = vmatprep.subr.mxu0 0.0
    %723 = vmatpush1.msra.mxu0 0.0
    %724 = vmatprep.subr.mxu0 0.0
    %725 = vmatpush1.msra.mxu0 0.0
    %726 = vmatprep.subr.mxu0 0.0
    %727 = vmatpush1.msra.mxu0 0.0
    %728 = vmatprep.subr.mxu0 0.0
    %729 = vmatpush1.msra.mxu0 0.0
    %730 = vmatprep.subr.mxu0 0.0
    %731 = vmatpush1.msra.mxu0 0.0
    %732 = vmatprep.subr.mxu0 0.0
    %733 = vmatpush1.msra.mxu0 0.0
    %734 = vmatprep.subr.mxu0 0.0
    %735 = vmatpush1.msra.mxu0 0.0
    %736 = vmatprep.subr.mxu0 0.0
    %737 = vmatpush1.msra.mxu0 0.0
    %738 = vmatprep.subr.mxu0 0.0
    %739 = vmatpush1.msra.mxu0 0.0
    %740 = vmatprep.subr.mxu0 0.0
    %741 = vmatpush1.msra.mxu0 0.0
    %742 = vmatprep.subr.mxu0 0.0
    %743 = vmatpush1.msra.mxu0 0.0
    %744 = vmatprep.subr.mxu0 0.0
    %745 = vmatpush1.msra.mxu0 0.0
    %746 = vmatprep.subr.mxu0 0.0
    %747 = vmatpush1.msra.mxu0 0.0
    %748 = vmatprep.subr.mxu0 0.0
    %749 = vmatpush1.msra.mxu0 0.0
    %750 = vmatprep.mubr.f32.mxu0 0.0
    %751 = vmatmul.mubr.f32.gmra.mrb[0].mxu0 %v681
    %v752 = vpop.f32.mrb[0].mxu0
    %v753 = vadd.f32 0.0, %v752
    %v754 = vpop.f32.mrb[0].mxu0
    %v755 = vadd.f32 0.0, %v754
    %756 = vmatprep.mubr.f32.mxu0 0.0
    %757 = vmatmul.mubr.f32.gmra.mrb[0].mxu0 %v684
    %v758 = vpop.f32.mrb[0].mxu0
    %v759 = vadd.f32 0.0, %v758
    %v760 = vpop.f32.mrb[0].mxu0
    %v761 = vadd.f32 0.0, %v760
    %762 = vdwg.mxu0
    %763 = vrot.lane.b32.xlu0 %v753, 1
    %v764 = vpop.permute.xlu0 %763
    %765 = vrot.lane.b32.xlu0 %v759, 1
    %v766 = vpop.permute.xlu0 %765
    %767 = vrot.lane.b32.xlu0 %v755, 1
    %v768 = vpop.permute.xlu0 %767
    %769 = vrot.lane.b32.xlu0 %v761, 1
    %v770 = vpop.permute.xlu0 %769
    %v771 = vsel %vm207, %v764, %v768
    %v772 = vsel %vm207, %v766, %v770
    %v773 = vsel %vm207, %v768, %v764
    %v774 = vsel %vm207, %v770, %v766
    %v775 = vmul.f32 %v773, %v110
    %v776 = vmul.f32 %v771, %v111
    %v777 = vmul.f32 %v774, %v110
    %v778 = vmul.f32 %v772, %v111
    %s779 = scalar_lea.vmem %s1, 96
    %v780 = vld [vmem:[%s779] sm:$0xff]
    %v781 = vld [vmem:[%s779 + $0x8] sm:$0xff]
    %v783 = vsel %vm115, %v780, 0
    %v786 = vsel %vm115, %v781, 0
    %788 = vmatprep.subr.mxu0 %v674
    %789 = vmatpush1.msra.mxu0 %v673
    %790 = vmatprep.subr.mxu0 %v676
    %791 = vmatpush1.msra.mxu0 %v675
    %792 = vmatprep.subr.mxu0 0.0
    %793 = vmatpush1.msra.mxu0 0.0
    %794 = vmatprep.subr.mxu0 0.0
    %795 = vmatpush1.msra.mxu0 0.0
    %796 = vmatprep.subr.mxu0 0.0
    %797 = vmatpush1.msra.mxu0 0.0
    %798 = vmatprep.subr.mxu0 0.0
    %799 = vmatpush1.msra.mxu0 0.0
    %800 = vmatprep.subr.mxu0 0.0
    %801 = vmatpush1.msra.mxu0 0.0
    %802 = vmatprep.subr.mxu0 0.0
    %803 = vmatpush1.msra.mxu0 0.0
    %804 = vmatprep.subr.mxu0 0.0
    %805 = vmatpush1.msra.mxu0 0.0
    %806 = vmatprep.subr.mxu0 0.0
    %807 = vmatpush1.msra.mxu0 0.0
    %808 = vmatprep.subr.mxu0 0.0
    %809 = vmatpush1.msra.mxu0 0.0
    %810 = vmatprep.subr.mxu0 0.0
    %811 = vmatpush1.msra.mxu0 0.0
    %812 = vmatprep.subr.mxu0 0.0
    %813 = vmatpush1.msra.mxu0 0.0
    %814 = vmatprep.subr.mxu0 0.0
    %815 = vmatpush1.msra.mxu0 0.0
    %816 = vmatprep.subr.mxu0 0.0
    %817 = vmatpush1.msra.mxu0 0.0
    %818 = vmatprep.subr.mxu0 0.0
    %819 = vmatpush1.msra.mxu0 0.0
    %820 = vmatprep.subr.mxu0 0.0
    %821 = vmatpush1.msra.mxu0 0.0
    %822 = vmatprep.subr.mxu0 0.0
    %823 = vmatpush1.msra.mxu0 0.0
    %824 = vmatprep.subr.mxu0 0.0
    %825 = vmatpush1.msra.mxu0 0.0
    %826 = vmatprep.subr.mxu0 0.0
    %827 = vmatpush1.msra.mxu0 0.0
    %828 = vmatprep.subr.mxu0 0.0
    %829 = vmatpush1.msra.mxu0 0.0
    %830 = vmatprep.subr.mxu0 0.0
    %831 = vmatpush1.msra.mxu0 0.0
    %832 = vmatprep.subr.mxu0 0.0
    %833 = vmatpush1.msra.mxu0 0.0
    %834 = vmatprep.subr.mxu0 0.0
    %835 = vmatpush1.msra.mxu0 0.0
    %836 = vmatprep.subr.mxu0 0.0
    %837 = vmatpush1.msra.mxu0 0.0
    %838 = vmatprep.subr.mxu0 0.0
    %839 = vmatpush1.msra.mxu0 0.0
    %840 = vmatprep.subr.mxu0 0.0
    %841 = vmatpush1.msra.mxu0 0.0
    %842 = vmatprep.subr.mxu0 0.0
    %843 = vmatpush1.msra.mxu0 0.0
    %844 = vmatprep.subr.mxu0 0.0
    %845 = vmatpush1.msra.mxu0 0.0
    %846 = vmatprep.subr.mxu0 0.0
    %847 = vmatpush1.msra.mxu0 0.0
    %848 = vmatprep.subr.mxu0 0.0
    %849 = vmatpush1.msra.mxu0 0.0
    %850 = vmatprep.subr.mxu0 0.0
    %851 = vmatpush1.msra.mxu0 0.0
    %852 = vmatprep.mubr.f32.mxu0 0.0
    %853 = vmatmul.mubr.f32.gmra.mrb[0].mxu0 %v783
    %v854 = vpop.f32.mrb[0].mxu0
    %v855 = vadd.f32 0.0, %v854
    %v856 = vpop.f32.mrb[0].mxu0
    %v857 = vadd.f32 0.0, %v856
    %858 = vmatprep.mubr.f32.mxu0 0.0
    %859 = vmatmul.mubr.f32.gmra.mrb[0].mxu0 %v786
    %v860 = vpop.f32.mrb[0].mxu0
    %v861 = vadd.f32 0.0, %v860
    %v862 = vpop.f32.mrb[0].mxu0
    %v863 = vadd.f32 0.0, %v862
    %864 = vdwg.mxu0
    %v865 = vadd.f32 %v775, %v855
    %v866 = vadd.f32 %v776, %v857
    %v867 = vadd.f32 %v777, %v861
    %v868 = vadd.f32 %v778, %v863
    %v869 = vmax.f32 %v865, 0.0
    %v870 = vmax.f32 %v866, 0.0
    %v871 = vmax.f32 %v867, 0.0
    %v872 = vmax.f32 %v868, 0.0
    %s873 = scalar_lea.vmem %s1, 112
    %v874 = vld [vmem:[%s873] sm:$0xff]
    %v875 = vld [vmem:[%s873 + $0x8] sm:$0xff]
    %v877 = vsel %vm115, %v874, 0
    %v880 = vsel %vm115, %v875, 0
    %882 = vmatprep.subr.mxu0 %v870
    %883 = vmatpush1.msra.mxu0 %v869
    %884 = vmatprep.subr.mxu0 %v872
    %885 = vmatpush1.msra.mxu0 %v871
    %886 = vmatprep.subr.mxu0 0.0
    %887 = vmatpush1.msra.mxu0 0.0
    %888 = vmatprep.subr.mxu0 0.0
    %889 = vmatpush1.msra.mxu0 0.0
    %890 = vmatprep.subr.mxu0 0.0
    %891 = vmatpush1.msra.mxu0 0.0
    %892 = vmatprep.subr.mxu0 0.0
    %893 = vmatpush1.msra.mxu0 0.0
    %894 = vmatprep.subr.mxu0 0.0
    %895 = vmatpush1.msra.mxu0 0.0
    %896 = vmatprep.subr.mxu0 0.0
    %897 = vmatpush1.msra.mxu0 0.0
    %898 = vmatprep.subr.mxu0 0.0
    %899 = vmatpush1.msra.mxu0 0.0
    %900 = vmatprep.subr.mxu0 0.0
    %901 = vmatpush1.msra.mxu0 0.0
    %902 = vmatprep.subr.mxu0 0.0
    %903 = vmatpush1.msra.mxu0 0.0
    %904 = vmatprep.subr.mxu0 0.0
    %905 = vmatpush1.msra.mxu0 0.0
    %906 = vmatprep.subr.mxu0 0.0
    %907 = vmatpush1.msra.mxu0 0.0
    %908 = vmatprep.subr.mxu0 0.0
    %909 = vmatpush1.msra.mxu0 0.0
    %910 = vmatprep.subr.mxu0 0.0
    %911 = vmatpush1.msra.mxu0 0.0
    %912 = vmatprep.subr.mxu0 0.0
    %913 = vmatpush1.msra.mxu0 0.0
    %914 = vmatprep.subr.mxu0 0.0
    %915 = vmatpush1.msra.mxu0 0.0
    %916 = vmatprep.subr.mxu0 0.0
    %917 = vmatpush1.msra.mxu0 0.0
    %918 = vmatprep.subr.mxu0 0.0
    %919 = vmatpush1.msra.mxu0 0.0
    %920 = vmatprep.subr.mxu0 0.0
    %921 = vmatpush1.msra.mxu0 0.0
    %922 = vmatprep.subr.mxu0 0.0
    %923 = vmatpush1.msra.mxu0 0.0
    %924 = vmatprep.subr.mxu0 0.0
    %925 = vmatpush1.msra.mxu0 0.0
    %926 = vmatprep.subr.mxu0 0.0
    %927 = vmatpush1.msra.mxu0 0.0
    %928 = vmatprep.subr.mxu0 0.0
    %929 = vmatpush1.msra.mxu0 0.0
    %930 = vmatprep.subr.mxu0 0.0
    %931 = vmatpush1.msra.mxu0 0.0
    %932 = vmatprep.subr.mxu0 0.0
    %933 = vmatpush1.msra.mxu0 0.0
    %934 = vmatprep.subr.mxu0 0.0
    %935 = vmatpush1.msra.mxu0 0.0
    %936 = vmatprep.subr.mxu0 0.0
    %937 = vmatpush1.msra.mxu0 0.0
    %938 = vmatprep.subr.mxu0 0.0
    %939 = vmatpush1.msra.mxu0 0.0
    %940 = vmatprep.subr.mxu0 0.0
    %941 = vmatpush1.msra.mxu0 0.0
    %942 = vmatprep.subr.mxu0 0.0
    %943 = vmatpush1.msra.mxu0 0.0
    %944 = vmatprep.subr.mxu0 0.0
    %945 = vmatpush1.msra.mxu0 0.0
    %946 = vmatprep.mubr.f32.mxu0 0.0
    %947 = vmatmul.mubr.f32.gmra.mrb[0].mxu0 %v877
    %v948 = vpop.f32.mrb[0].mxu0
    %v949 = vadd.f32 0.0, %v948
    %v950 = vpop.f32.mrb[0].mxu0
    %v951 = vadd.f32 0.0, %v950
    %952 = vmatprep.mubr.f32.mxu0 0.0
    %953 = vmatmul.mubr.f32.gmra.mrb[0].mxu0 %v880
    %v954 = vpop.f32.mrb[0].mxu0
    %v955 = vadd.f32 0.0, %v954
    %v956 = vpop.f32.mrb[0].mxu0
    %v957 = vadd.f32 0.0, %v956
    %958 = vdwg.mxu0
    %959 = vrot.lane.b32.xlu0 %v949, 1
    %v960 = vpop.permute.xlu0 %959
    %961 = vrot.lane.b32.xlu0 %v955, 1
    %v962 = vpop.permute.xlu0 %961
    %963 = vrot.lane.b32.xlu0 %v951, 1
    %v964 = vpop.permute.xlu0 %963
    %965 = vrot.lane.b32.xlu0 %v957, 1
    %v966 = vpop.permute.xlu0 %965
    %v967 = vsel %vm207, %v960, %v964
    %v968 = vsel %vm207, %v962, %v966
    %v969 = vsel %vm207, %v964, %v960
    %v970 = vsel %vm207, %v966, %v962
    %v971 = vmul.f32 %v969, %v110
    %v972 = vmul.f32 %v967, %v111
    %v973 = vmul.f32 %v970, %v110
    %v974 = vmul.f32 %v968, %v111
    %s975 = scalar_lea.vmem %s1, 128
    %v976 = vld [vmem:[%s975] sm:$0xff]
    %v977 = vld [vmem:[%s975 + $0x8] sm:$0xff]
    %v979 = vsel %vm115, %v976, 0
    %v982 = vsel %vm115, %v977, 0
    %984 = vmatprep.subr.mxu0 %v870
    %985 = vmatpush1.msra.mxu0 %v869
    %986 = vmatprep.subr.mxu0 %v872
    %987 = vmatpush1.msra.mxu0 %v871
    %988 = vmatprep.subr.mxu0 0.0
    %989 = vmatpush1.msra.mxu0 0.0
    %990 = vmatprep.subr.mxu0 0.0
    %991 = vmatpush1.msra.mxu0 0.0
    %992 = vmatprep.subr.mxu0 0.0
    %993 = vmatpush1.msra.mxu0 0.0
    %994 = vmatprep.subr.mxu0 0.0
    %995 = vmatpush1.msra.mxu0 0.0
    %996 = vmatprep.subr.mxu0 0.0
    %997 = vmatpush1.msra.mxu0 0.0
    %998 = vmatprep.subr.mxu0 0.0
    %999 = vmatpush1.msra.mxu0 0.0
    %1000 = vmatprep.subr.mxu0 0.0
    %1001 = vmatpush1.msra.mxu0 0.0
    %1002 = vmatprep.subr.mxu0 0.0
    %1003 = vmatpush1.msra.mxu0 0.0
    %1004 = vmatprep.subr.mxu0 0.0
    %1005 = vmatpush1.msra.mxu0 0.0
    %1006 = vmatprep.subr.mxu0 0.0
    %1007 = vmatpush1.msra.mxu0 0.0
    %1008 = vmatprep.subr.mxu0 0.0
    %1009 = vmatpush1.msra.mxu0 0.0
    %1010 = vmatprep.subr.mxu0 0.0
    %1011 = vmatpush1.msra.mxu0 0.0
    %1012 = vmatprep.subr.mxu0 0.0
    %1013 = vmatpush1.msra.mxu0 0.0
    %1014 = vmatprep.subr.mxu0 0.0
    %1015 = vmatpush1.msra.mxu0 0.0
    %1016 = vmatprep.subr.mxu0 0.0
    %1017 = vmatpush1.msra.mxu0 0.0
    %1018 = vmatprep.subr.mxu0 0.0
    %1019 = vmatpush1.msra.mxu0 0.0
    %1020 = vmatprep.subr.mxu0 0.0
    %1021 = vmatpush1.msra.mxu0 0.0
    %1022 = vmatprep.subr.mxu0 0.0
    %1023 = vmatpush1.msra.mxu0 0.0
    %1024 = vmatprep.subr.mxu0 0.0
    %1025 = vmatpush1.msra.mxu0 0.0
    %1026 = vmatprep.subr.mxu0 0.0
    %1027 = vmatpush1.msra.mxu0 0.0
    %1028 = vmatprep.subr.mxu0 0.0
    %1029 = vmatpush1.msra.mxu0 0.0
    %1030 = vmatprep.subr.mxu0 0.0
    %1031 = vmatpush1.msra.mxu0 0.0
    %1032 = vmatprep.subr.mxu0 0.0
    %1033 = vmatpush1.msra.mxu0 0.0
    %1034 = vmatprep.subr.mxu0 0.0
    %1035 = vmatpush1.msra.mxu0 0.0
    %1036 = vmatprep.subr.mxu0 0.0
    %1037 = vmatpush1.msra.mxu0 0.0
    %1038 = vmatprep.subr.mxu0 0.0
    %1039 = vmatpush1.msra.mxu0 0.0
    %1040 = vmatprep.subr.mxu0 0.0
    %1041 = vmatpush1.msra.mxu0 0.0
    %1042 = vmatprep.subr.mxu0 0.0
    %1043 = vmatpush1.msra.mxu0 0.0
    %1044 = vmatprep.subr.mxu0 0.0
    %1045 = vmatpush1.msra.mxu0 0.0
    %1046 = vmatprep.subr.mxu0 0.0
    %1047 = vmatpush1.msra.mxu0 0.0
    %1048 = vmatprep.mubr.f32.mxu0 0.0
    %1049 = vmatmul.mubr.f32.gmra.mrb[0].mxu0 %v979
    %v1050 = vpop.f32.mrb[0].mxu0
    %v1051 = vadd.f32 0.0, %v1050
    %v1052 = vpop.f32.mrb[0].mxu0
    %v1053 = vadd.f32 0.0, %v1052
    %1054 = vmatprep.mubr.f32.mxu0 0.0
    %1055 = vmatmul.mubr.f32.gmra.mrb[0].mxu0 %v982
    %v1056 = vpop.f32.mrb[0].mxu0
    %v1057 = vadd.f32 0.0, %v1056
    %v1058 = vpop.f32.mrb[0].mxu0
    %v1059 = vadd.f32 0.0, %v1058
    %1060 = vdwg.mxu0
    %v1061 = vadd.f32 %v971, %v1051
    %v1062 = vadd.f32 %v972, %v1053
    %v1063 = vadd.f32 %v973, %v1057
    %v1064 = vadd.f32 %v974, %v1059
    %v1065 = vmax.f32 %v1061, 0.0
    %v1066 = vmax.f32 %v1062, 0.0
    %v1067 = vmax.f32 %v1063, 0.0
    %v1068 = vmax.f32 %v1064, 0.0
    %s1069 = scalar_lea.vmem %s1, 144
    %v1070 = vld [vmem:[%s1069] sm:$0xff]
    %v1071 = vld [vmem:[%s1069 + $0x8] sm:$0xff]
    %v1073 = vsel %vm115, %v1070, 0
    %v1076 = vsel %vm115, %v1071, 0
    %1078 = vmatprep.subr.mxu0 %v674
    %1079 = vmatpush1.msra.mxu0 %v673
    %1080 = vmatprep.subr.mxu0 %v676
    %1081 = vmatpush1.msra.mxu0 %v675
    %1082 = vmatprep.subr.mxu0 0.0
    %1083 = vmatpush1.msra.mxu0 0.0
    %1084 = vmatprep.subr.mxu0 0.0
    %1085 = vmatpush1.msra.mxu0 0.0
    %1086 = vmatprep.subr.mxu0 0.0
    %1087 = vmatpush1.msra.mxu0 0.0
    %1088 = vmatprep.subr.mxu0 0.0
    %1089 = vmatpush1.msra.mxu0 0.0
    %1090 = vmatprep.subr.mxu0 0.0
    %1091 = vmatpush1.msra.mxu0 0.0
    %1092 = vmatprep.subr.mxu0 0.0
    %1093 = vmatpush1.msra.mxu0 0.0
    %1094 = vmatprep.subr.mxu0 0.0
    %1095 = vmatpush1.msra.mxu0 0.0
    %1096 = vmatprep.subr.mxu0 0.0
    %1097 = vmatpush1.msra.mxu0 0.0
    %1098 = vmatprep.subr.mxu0 0.0
    %1099 = vmatpush1.msra.mxu0 0.0
    %1100 = vmatprep.subr.mxu0 0.0
    %1101 = vmatpush1.msra.mxu0 0.0
    %1102 = vmatprep.subr.mxu0 0.0
    %1103 = vmatpush1.msra.mxu0 0.0
    %1104 = vmatprep.subr.mxu0 0.0
    %1105 = vmatpush1.msra.mxu0 0.0
    %1106 = vmatprep.subr.mxu0 0.0
    %1107 = vmatpush1.msra.mxu0 0.0
    %1108 = vmatprep.subr.mxu0 0.0
    %1109 = vmatpush1.msra.mxu0 0.0
    %1110 = vmatprep.subr.mxu0 0.0
    %1111 = vmatpush1.msra.mxu0 0.0
    %1112 = vmatprep.subr.mxu0 0.0
    %1113 = vmatpush1.msra.mxu0 0.0
    %1114 = vmatprep.subr.mxu0 0.0
    %1115 = vmatpush1.msra.mxu0 0.0
    %1116 = vmatprep.subr.mxu0 0.0
    %1117 = vmatpush1.msra.mxu0 0.0
    %1118 = vmatprep.subr.mxu0 0.0
    %1119 = vmatpush1.msra.mxu0 0.0
    %1120 = vmatprep.subr.mxu0 0.0
    %1121 = vmatpush1.msra.mxu0 0.0
    %1122 = vmatprep.subr.mxu0 0.0
    %1123 = vmatpush1.msra.mxu0 0.0
    %1124 = vmatprep.subr.mxu0 0.0
    %1125 = vmatpush1.msra.mxu0 0.0
    %1126 = vmatprep.subr.mxu0 0.0
    %1127 = vmatpush1.msra.mxu0 0.0
    %1128 = vmatprep.subr.mxu0 0.0
    %1129 = vmatpush1.msra.mxu0 0.0
    %1130 = vmatprep.subr.mxu0 0.0
    %1131 = vmatpush1.msra.mxu0 0.0
    %1132 = vmatprep.subr.mxu0 0.0
    %1133 = vmatpush1.msra.mxu0 0.0
    %1134 = vmatprep.subr.mxu0 0.0
    %1135 = vmatpush1.msra.mxu0 0.0
    %1136 = vmatprep.subr.mxu0 0.0
    %1137 = vmatpush1.msra.mxu0 0.0
    %1138 = vmatprep.subr.mxu0 0.0
    %1139 = vmatpush1.msra.mxu0 0.0
    %1140 = vmatprep.subr.mxu0 0.0
    %1141 = vmatpush1.msra.mxu0 0.0
    %1142 = vmatprep.mubr.f32.mxu0 0.0
    %1143 = vmatmul.mubr.f32.gmra.mrb[0].mxu0 %v1073
    %v1144 = vpop.f32.mrb[0].mxu0
    %v1145 = vadd.f32 0.0, %v1144
    %v1146 = vpop.f32.mrb[0].mxu0
    %v1147 = vadd.f32 0.0, %v1146
    %1148 = vmatprep.mubr.f32.mxu0 0.0
    %1149 = vmatmul.mubr.f32.gmra.mrb[0].mxu0 %v1076
    %v1150 = vpop.f32.mrb[0].mxu0
    %v1151 = vadd.f32 0.0, %v1150
    %v1152 = vpop.f32.mrb[0].mxu0
    %v1153 = vadd.f32 0.0, %v1152
    %1154 = vdwg.mxu0
    %v1155 = vadd.f32 %v1065, %v1145
    %v1156 = vadd.f32 %v1066, %v1147
    %v1157 = vadd.f32 %v1067, %v1151
    %v1158 = vadd.f32 %v1068, %v1153
    %s1159 = scalar_lea.vmem %s1, 160
    %v1160 = vld [vmem:[%s1159] sm:$0xff]
    %v1161 = vld [vmem:[%s1159 + $0x8] sm:$0xff]
    %v1163 = vsel %vm115, %v1160, 0
    %v1166 = vsel %vm115, %v1161, 0
    %1168 = vmatprep.subr.mxu0 %v1156
    %1169 = vmatpush1.msra.mxu0 %v1155
    %1170 = vmatprep.subr.mxu0 %v1158
    %1171 = vmatpush1.msra.mxu0 %v1157
    %1172 = vmatprep.subr.mxu0 0.0
    %1173 = vmatpush1.msra.mxu0 0.0
    %1174 = vmatprep.subr.mxu0 0.0
    %1175 = vmatpush1.msra.mxu0 0.0
    %1176 = vmatprep.subr.mxu0 0.0
    %1177 = vmatpush1.msra.mxu0 0.0
    %1178 = vmatprep.subr.mxu0 0.0
    %1179 = vmatpush1.msra.mxu0 0.0
    %1180 = vmatprep.subr.mxu0 0.0
    %1181 = vmatpush1.msra.mxu0 0.0
    %1182 = vmatprep.subr.mxu0 0.0
    %1183 = vmatpush1.msra.mxu0 0.0
    %1184 = vmatprep.subr.mxu0 0.0
    %1185 = vmatpush1.msra.mxu0 0.0
    %1186 = vmatprep.subr.mxu0 0.0
    %1187 = vmatpush1.msra.mxu0 0.0
    %1188 = vmatprep.subr.mxu0 0.0
    %1189 = vmatpush1.msra.mxu0 0.0
    %1190 = vmatprep.subr.mxu0 0.0
    %1191 = vmatpush1.msra.mxu0 0.0
    %1192 = vmatprep.subr.mxu0 0.0
    %1193 = vmatpush1.msra.mxu0 0.0
    %1194 = vmatprep.subr.mxu0 0.0
    %1195 = vmatpush1.msra.mxu0 0.0
    %1196 = vmatprep.subr.mxu0 0.0
    %1197 = vmatpush1.msra.mxu0 0.0
    %1198 = vmatprep.subr.mxu0 0.0
    %1199 = vmatpush1.msra.mxu0 0.0
    %1200 = vmatprep.subr.mxu0 0.0
    %1201 = vmatpush1.msra.mxu0 0.0
    %1202 = vmatprep.subr.mxu0 0.0
    %1203 = vmatpush1.msra.mxu0 0.0
    %1204 = vmatprep.subr.mxu0 0.0
    %1205 = vmatpush1.msra.mxu0 0.0
    %1206 = vmatprep.subr.mxu0 0.0
    %1207 = vmatpush1.msra.mxu0 0.0
    %1208 = vmatprep.subr.mxu0 0.0
    %1209 = vmatpush1.msra.mxu0 0.0
    %1210 = vmatprep.subr.mxu0 0.0
    %1211 = vmatpush1.msra.mxu0 0.0
    %1212 = vmatprep.subr.mxu0 0.0
    %1213 = vmatpush1.msra.mxu0 0.0
    %1214 = vmatprep.subr.mxu0 0.0
    %1215 = vmatpush1.msra.mxu0 0.0
    %1216 = vmatprep.subr.mxu0 0.0
    %1217 = vmatpush1.msra.mxu0 0.0
    %1218 = vmatprep.subr.mxu0 0.0
    %1219 = vmatpush1.msra.mxu0 0.0
    %1220 = vmatprep.subr.mxu0 0.0
    %1221 = vmatpush1.msra.mxu0 0.0
    %1222 = vmatprep.subr.mxu0 0.0
    %1223 = vmatpush1.msra.mxu0 0.0
    %1224 = vmatprep.subr.mxu0 0.0
    %1225 = vmatpush1.msra.mxu0 0.0
    %1226 = vmatprep.subr.mxu0 0.0
    %1227 = vmatpush1.msra.mxu0 0.0
    %1228 = vmatprep.subr.mxu0 0.0
    %1229 = vmatpush1.msra.mxu0 0.0
    %1230 = vmatprep.subr.mxu0 0.0
    %1231 = vmatpush1.msra.mxu0 0.0
    %1232 = vmatprep.mubr.f32.mxu0 0.0
    %1233 = vmatmul.mubr.f32.gmra.mrb[0].mxu0 %v1163
    %v1234 = vpop.f32.mrb[0].mxu0
    %v1235 = vadd.f32 0.0, %v1234
    %v1236 = vpop.f32.mrb[0].mxu0
    %v1237 = vadd.f32 0.0, %v1236
    %1238 = vmatprep.mubr.f32.mxu0 0.0
    %1239 = vmatmul.mubr.f32.gmra.mrb[0].mxu0 %v1166
    %v1240 = vpop.f32.mrb[0].mxu0
    %v1241 = vadd.f32 0.0, %v1240
    %v1242 = vpop.f32.mrb[0].mxu0
    %v1243 = vadd.f32 0.0, %v1242
    %1244 = vdwg.mxu0
    %1245 = vrot.lane.b32.xlu0 %v1235, 1
    %v1246 = vpop.permute.xlu0 %1245
    %1247 = vrot.lane.b32.xlu0 %v1241, 1
    %v1248 = vpop.permute.xlu0 %1247
    %1249 = vrot.lane.b32.xlu0 %v1237, 1
    %v1250 = vpop.permute.xlu0 %1249
    %1251 = vrot.lane.b32.xlu0 %v1243, 1
    %v1252 = vpop.permute.xlu0 %1251
    %v1253 = vsel %vm207, %v1246, %v1250
    %v1254 = vsel %vm207, %v1248, %v1252
    %v1255 = vsel %vm207, %v1250, %v1246
    %v1256 = vsel %vm207, %v1252, %v1248
    %v1257 = vmul.f32 %v1255, %v64
    %v1258 = vmul.f32 %v1253, %v65
    %v1259 = vmul.f32 %v1256, %v66
    %v1260 = vmul.f32 %v1254, %v67
    %1261 = vrot.lane.b32.xlu0 %v1235, 2
    %v1262 = vpop.permute.xlu0 %1261
    %1263 = vrot.lane.b32.xlu0 %v1241, 2
    %v1264 = vpop.permute.xlu0 %1263
    %1265 = vrot.lane.b32.xlu0 %v1237, 2
    %v1266 = vpop.permute.xlu0 %1265
    %1267 = vrot.lane.b32.xlu0 %v1243, 2
    %v1268 = vpop.permute.xlu0 %1267
    %v1269 = vsel %vm224, %v1262, %v1266
    %v1270 = vsel %vm224, %v1264, %v1268
    %v1271 = vsel %vm224, %v1266, %v1262
    %v1272 = vsel %vm224, %v1268, %v1264
    %v1273 = vmul.f32 %v1271, %v84
    %v1274 = vmul.f32 %v1269, %v85
    %v1275 = vmul.f32 %v1272, %v86
    %v1276 = vmul.f32 %v1270, %v87
    %v1277 = vadd.f32 %v1257, %v1273
    %v1278 = vadd.f32 %v1258, %v1274
    %v1279 = vadd.f32 %v1259, %v1275
    %v1280 = vadd.f32 %v1260, %v1276
    %1281 = vrot.lane.b32.xlu0 %v1235, 4
    %v1282 = vpop.permute.xlu0 %1281
    %1283 = vrot.lane.b32.xlu0 %v1241, 4
    %v1284 = vpop.permute.xlu0 %1283
    %1285 = vrot.lane.b32.xlu0 %v1237, 4
    %v1286 = vpop.permute.xlu0 %1285
    %1287 = vrot.lane.b32.xlu0 %v1243, 4
    %v1288 = vpop.permute.xlu0 %1287
    %v1289 = vsel %vm245, %v1282, %v1286
    %v1290 = vsel %vm245, %v1284, %v1288
    %v1291 = vsel %vm245, %v1286, %v1282
    %v1292 = vsel %vm245, %v1288, %v1284
    %v1293 = vmul.f32 %v1291, %v104
    %v1294 = vmul.f32 %v1289, %v105
    %v1295 = vmul.f32 %v1292, %v106
    %v1296 = vmul.f32 %v1290, %v107
    %v1297 = vadd.f32 %v1277, %v1293
    %v1298 = vadd.f32 %v1278, %v1294
    %v1299 = vadd.f32 %v1279, %v1295
    %v1300 = vadd.f32 %v1280, %v1296
    %s1301 = scalar_lea.vmem %s1, 176
    %v1302 = vld [vmem:[%s1301] sm:$0xff]
    %v1303 = vld [vmem:[%s1301 + $0x8] sm:$0xff]
    %v1305 = vsel %vm115, %v1302, 0
    %v1308 = vsel %vm115, %v1303, 0
    %1310 = vmatprep.subr.mxu0 %v1156
    %1311 = vmatpush1.msra.mxu0 %v1155
    %1312 = vmatprep.subr.mxu0 %v1158
    %1313 = vmatpush1.msra.mxu0 %v1157
    %1314 = vmatprep.subr.mxu0 0.0
    %1315 = vmatpush1.msra.mxu0 0.0
    %1316 = vmatprep.subr.mxu0 0.0
    %1317 = vmatpush1.msra.mxu0 0.0
    %1318 = vmatprep.subr.mxu0 0.0
    %1319 = vmatpush1.msra.mxu0 0.0
    %1320 = vmatprep.subr.mxu0 0.0
    %1321 = vmatpush1.msra.mxu0 0.0
    %1322 = vmatprep.subr.mxu0 0.0
    %1323 = vmatpush1.msra.mxu0 0.0
    %1324 = vmatprep.subr.mxu0 0.0
    %1325 = vmatpush1.msra.mxu0 0.0
    %1326 = vmatprep.subr.mxu0 0.0
    %1327 = vmatpush1.msra.mxu0 0.0
    %1328 = vmatprep.subr.mxu0 0.0
    %1329 = vmatpush1.msra.mxu0 0.0
    %1330 = vmatprep.subr.mxu0 0.0
    %1331 = vmatpush1.msra.mxu0 0.0
    %1332 = vmatprep.subr.mxu0 0.0
    %1333 = vmatpush1.msra.mxu0 0.0
    %1334 = vmatprep.subr.mxu0 0.0
    %1335 = vmatpush1.msra.mxu0 0.0
    %1336 = vmatprep.subr.mxu0 0.0
    %1337 = vmatpush1.msra.mxu0 0.0
    %1338 = vmatprep.subr.mxu0 0.0
    %1339 = vmatpush1.msra.mxu0 0.0
    %1340 = vmatprep.subr.mxu0 0.0
    %1341 = vmatpush1.msra.mxu0 0.0
    %1342 = vmatprep.subr.mxu0 0.0
    %1343 = vmatpush1.msra.mxu0 0.0
    %1344 = vmatprep.subr.mxu0 0.0
    %1345 = vmatpush1.msra.mxu0 0.0
    %1346 = vmatprep.subr.mxu0 0.0
    %1347 = vmatpush1.msra.mxu0 0.0
    %1348 = vmatprep.subr.mxu0 0.0
    %1349 = vmatpush1.msra.mxu0 0.0
    %1350 = vmatprep.subr.mxu0 0.0
    %1351 = vmatpush1.msra.mxu0 0.0
    %1352 = vmatprep.subr.mxu0 0.0
    %1353 = vmatpush1.msra.mxu0 0.0
    %1354 = vmatprep.subr.mxu0 0.0
    %1355 = vmatpush1.msra.mxu0 0.0
    %1356 = vmatprep.subr.mxu0 0.0
    %1357 = vmatpush1.msra.mxu0 0.0
    %1358 = vmatprep.subr.mxu0 0.0
    %1359 = vmatpush1.msra.mxu0 0.0
    %1360 = vmatprep.subr.mxu0 0.0
    %1361 = vmatpush1.msra.mxu0 0.0
    %1362 = vmatprep.subr.mxu0 0.0
    %1363 = vmatpush1.msra.mxu0 0.0
    %1364 = vmatprep.subr.mxu0 0.0
    %1365 = vmatpush1.msra.mxu0 0.0
    %1366 = vmatprep.subr.mxu0 0.0
    %1367 = vmatpush1.msra.mxu0 0.0
    %1368 = vmatprep.subr.mxu0 0.0
    %1369 = vmatpush1.msra.mxu0 0.0
    %1370 = vmatprep.subr.mxu0 0.0
    %1371 = vmatpush1.msra.mxu0 0.0
    %1372 = vmatprep.subr.mxu0 0.0
    %1373 = vmatpush1.msra.mxu0 0.0
    %1374 = vmatprep.mubr.f32.mxu0 0.0
    %1375 = vmatmul.mubr.f32.gmra.mrb[0].mxu0 %v1305
    %v1376 = vpop.f32.mrb[0].mxu0
    %v1377 = vadd.f32 0.0, %v1376
    %v1378 = vpop.f32.mrb[0].mxu0
    %v1379 = vadd.f32 0.0, %v1378
    %1380 = vmatprep.mubr.f32.mxu0 0.0
    %1381 = vmatmul.mubr.f32.gmra.mrb[0].mxu0 %v1308
    %v1382 = vpop.f32.mrb[0].mxu0
    %v1383 = vadd.f32 0.0, %v1382
    %v1384 = vpop.f32.mrb[0].mxu0
    %v1385 = vadd.f32 0.0, %v1384
    %1386 = vdwg.mxu0
    %v1387 = vadd.f32 %v1297, %v1377
    %v1388 = vadd.f32 %v1298, %v1379
    %v1389 = vadd.f32 %v1299, %v1383
    %v1390 = vadd.f32 %v1300, %v1385
    %v1391 = vmax.f32 %v1387, 0.0
    %v1392 = vmax.f32 %v1388, 0.0
    %v1393 = vmax.f32 %v1389, 0.0
    %v1394 = vmax.f32 %v1390, 0.0
    %s1395 = scalar_lea.vmem %s1, 192
    %v1396 = vld [vmem:[%s1395] sm:$0xff]
    %v1397 = vld [vmem:[%s1395 + $0x8] sm:$0xff]
    %v1399 = vsel %vm115, %v1396, 0
    %v1402 = vsel %vm115, %v1397, 0
    %1404 = vmatprep.subr.mxu0 %v1392
    %1405 = vmatpush1.msra.mxu0 %v1391
    %1406 = vmatprep.subr.mxu0 %v1394
    %1407 = vmatpush1.msra.mxu0 %v1393
    %1408 = vmatprep.subr.mxu0 0.0
    %1409 = vmatpush1.msra.mxu0 0.0
    %1410 = vmatprep.subr.mxu0 0.0
    %1411 = vmatpush1.msra.mxu0 0.0
    %1412 = vmatprep.subr.mxu0 0.0
    %1413 = vmatpush1.msra.mxu0 0.0
    %1414 = vmatprep.subr.mxu0 0.0
    %1415 = vmatpush1.msra.mxu0 0.0
    %1416 = vmatprep.subr.mxu0 0.0
    %1417 = vmatpush1.msra.mxu0 0.0
    %1418 = vmatprep.subr.mxu0 0.0
    %1419 = vmatpush1.msra.mxu0 0.0
    %1420 = vmatprep.subr.mxu0 0.0
    %1421 = vmatpush1.msra.mxu0 0.0
    %1422 = vmatprep.subr.mxu0 0.0
    %1423 = vmatpush1.msra.mxu0 0.0
    %1424 = vmatprep.subr.mxu0 0.0
    %1425 = vmatpush1.msra.mxu0 0.0
    %1426 = vmatprep.subr.mxu0 0.0
    %1427 = vmatpush1.msra.mxu0 0.0
    %1428 = vmatprep.subr.mxu0 0.0
    %1429 = vmatpush1.msra.mxu0 0.0
    %1430 = vmatprep.subr.mxu0 0.0
    %1431 = vmatpush1.msra.mxu0 0.0
    %1432 = vmatprep.subr.mxu0 0.0
    %1433 = vmatpush1.msra.mxu0 0.0
    %1434 = vmatprep.subr.mxu0 0.0
    %1435 = vmatpush1.msra.mxu0 0.0
    %1436 = vmatprep.subr.mxu0 0.0
    %1437 = vmatpush1.msra.mxu0 0.0
    %1438 = vmatprep.subr.mxu0 0.0
    %1439 = vmatpush1.msra.mxu0 0.0
    %1440 = vmatprep.subr.mxu0 0.0
    %1441 = vmatpush1.msra.mxu0 0.0
    %1442 = vmatprep.subr.mxu0 0.0
    %1443 = vmatpush1.msra.mxu0 0.0
    %1444 = vmatprep.subr.mxu0 0.0
    %1445 = vmatpush1.msra.mxu0 0.0
    %1446 = vmatprep.subr.mxu0 0.0
    %1447 = vmatpush1.msra.mxu0 0.0
    %1448 = vmatprep.subr.mxu0 0.0
    %1449 = vmatpush1.msra.mxu0 0.0
    %1450 = vmatprep.subr.mxu0 0.0
    %1451 = vmatpush1.msra.mxu0 0.0
    %1452 = vmatprep.subr.mxu0 0.0
    %1453 = vmatpush1.msra.mxu0 0.0
    %1454 = vmatprep.subr.mxu0 0.0
    %1455 = vmatpush1.msra.mxu0 0.0
    %1456 = vmatprep.subr.mxu0 0.0
    %1457 = vmatpush1.msra.mxu0 0.0
    %1458 = vmatprep.subr.mxu0 0.0
    %1459 = vmatpush1.msra.mxu0 0.0
    %1460 = vmatprep.subr.mxu0 0.0
    %1461 = vmatpush1.msra.mxu0 0.0
    %1462 = vmatprep.subr.mxu0 0.0
    %1463 = vmatpush1.msra.mxu0 0.0
    %1464 = vmatprep.subr.mxu0 0.0
    %1465 = vmatpush1.msra.mxu0 0.0
    %1466 = vmatprep.subr.mxu0 0.0
    %1467 = vmatpush1.msra.mxu0 0.0
    %1468 = vmatprep.mubr.f32.mxu0 0.0
    %1469 = vmatmul.mubr.f32.gmra.mrb[0].mxu0 %v1399
    %v1470 = vpop.f32.mrb[0].mxu0
    %v1471 = vadd.f32 0.0, %v1470
    %v1472 = vpop.f32.mrb[0].mxu0
    %v1473 = vadd.f32 0.0, %v1472
    %1474 = vmatprep.mubr.f32.mxu0 0.0
    %1475 = vmatmul.mubr.f32.gmra.mrb[0].mxu0 %v1402
    %v1476 = vpop.f32.mrb[0].mxu0
    %v1477 = vadd.f32 0.0, %v1476
    %v1478 = vpop.f32.mrb[0].mxu0
    %v1479 = vadd.f32 0.0, %v1478
    %1480 = vdwg.mxu0
    %1481 = vrot.lane.b32.xlu0 %v1471, 1
    %v1482 = vpop.permute.xlu0 %1481
    %1483 = vrot.lane.b32.xlu0 %v1477, 1
    %v1484 = vpop.permute.xlu0 %1483
    %1485 = vrot.lane.b32.xlu0 %v1473, 1
    %v1486 = vpop.permute.xlu0 %1485
    %1487 = vrot.lane.b32.xlu0 %v1479, 1
    %v1488 = vpop.permute.xlu0 %1487
    %v1489 = vsel %vm207, %v1482, %v1486
    %v1490 = vsel %vm207, %v1484, %v1488
    %v1491 = vsel %vm207, %v1486, %v1482
    %v1492 = vsel %vm207, %v1488, %v1484
    %v1493 = vmul.f32 %v1491, %v64
    %v1494 = vmul.f32 %v1489, %v65
    %v1495 = vmul.f32 %v1492, %v66
    %v1496 = vmul.f32 %v1490, %v67
    %1497 = vrot.lane.b32.xlu0 %v1471, 2
    %v1498 = vpop.permute.xlu0 %1497
    %1499 = vrot.lane.b32.xlu0 %v1477, 2
    %v1500 = vpop.permute.xlu0 %1499
    %1501 = vrot.lane.b32.xlu0 %v1473, 2
    %v1502 = vpop.permute.xlu0 %1501
    %1503 = vrot.lane.b32.xlu0 %v1479, 2
    %v1504 = vpop.permute.xlu0 %1503
    %v1505 = vsel %vm224, %v1498, %v1502
    %v1506 = vsel %vm224, %v1500, %v1504
    %v1507 = vsel %vm224, %v1502, %v1498
    %v1508 = vsel %vm224, %v1504, %v1500
    %v1509 = vmul.f32 %v1507, %v84
    %v1510 = vmul.f32 %v1505, %v85
    %v1511 = vmul.f32 %v1508, %v86
    %v1512 = vmul.f32 %v1506, %v87
    %v1513 = vadd.f32 %v1493, %v1509
    %v1514 = vadd.f32 %v1494, %v1510
    %v1515 = vadd.f32 %v1495, %v1511
    %v1516 = vadd.f32 %v1496, %v1512
    %1517 = vrot.lane.b32.xlu0 %v1471, 4
    %v1518 = vpop.permute.xlu0 %1517
    %1519 = vrot.lane.b32.xlu0 %v1477, 4
    %v1520 = vpop.permute.xlu0 %1519
    %1521 = vrot.lane.b32.xlu0 %v1473, 4
    %v1522 = vpop.permute.xlu0 %1521
    %1523 = vrot.lane.b32.xlu0 %v1479, 4
    %v1524 = vpop.permute.xlu0 %1523
    %v1525 = vsel %vm245, %v1518, %v1522
    %v1526 = vsel %vm245, %v1520, %v1524
    %v1527 = vsel %vm245, %v1522, %v1518
    %v1528 = vsel %vm245, %v1524, %v1520
    %v1529 = vmul.f32 %v1527, %v104
    %v1530 = vmul.f32 %v1525, %v105
    %v1531 = vmul.f32 %v1528, %v106
    %v1532 = vmul.f32 %v1526, %v107
    %v1533 = vadd.f32 %v1513, %v1529
    %v1534 = vadd.f32 %v1514, %v1530
    %v1535 = vadd.f32 %v1515, %v1531
    %v1536 = vadd.f32 %v1516, %v1532
    %s1537 = scalar_lea.vmem %s1, 208
    %v1538 = vld [vmem:[%s1537] sm:$0xff]
    %v1539 = vld [vmem:[%s1537 + $0x8] sm:$0xff]
    %v1541 = vsel %vm115, %v1538, 0
    %v1544 = vsel %vm115, %v1539, 0
    %1546 = vmatprep.subr.mxu0 %v1392
    %1547 = vmatpush1.msra.mxu0 %v1391
    %1548 = vmatprep.subr.mxu0 %v1394
    %1549 = vmatpush1.msra.mxu0 %v1393
    %1550 = vmatprep.subr.mxu0 0.0
    %1551 = vmatpush1.msra.mxu0 0.0
    %1552 = vmatprep.subr.mxu0 0.0
    %1553 = vmatpush1.msra.mxu0 0.0
    %1554 = vmatprep.subr.mxu0 0.0
    %1555 = vmatpush1.msra.mxu0 0.0
    %1556 = vmatprep.subr.mxu0 0.0
    %1557 = vmatpush1.msra.mxu0 0.0
    %1558 = vmatprep.subr.mxu0 0.0
    %1559 = vmatpush1.msra.mxu0 0.0
    %1560 = vmatprep.subr.mxu0 0.0
    %1561 = vmatpush1.msra.mxu0 0.0
    %1562 = vmatprep.subr.mxu0 0.0
    %1563 = vmatpush1.msra.mxu0 0.0
    %1564 = vmatprep.subr.mxu0 0.0
    %1565 = vmatpush1.msra.mxu0 0.0
    %1566 = vmatprep.subr.mxu0 0.0
    %1567 = vmatpush1.msra.mxu0 0.0
    %1568 = vmatprep.subr.mxu0 0.0
    %1569 = vmatpush1.msra.mxu0 0.0
    %1570 = vmatprep.subr.mxu0 0.0
    %1571 = vmatpush1.msra.mxu0 0.0
    %1572 = vmatprep.subr.mxu0 0.0
    %1573 = vmatpush1.msra.mxu0 0.0
    %1574 = vmatprep.subr.mxu0 0.0
    %1575 = vmatpush1.msra.mxu0 0.0
    %1576 = vmatprep.subr.mxu0 0.0
    %1577 = vmatpush1.msra.mxu0 0.0
    %1578 = vmatprep.subr.mxu0 0.0
    %1579 = vmatpush1.msra.mxu0 0.0
    %1580 = vmatprep.subr.mxu0 0.0
    %1581 = vmatpush1.msra.mxu0 0.0
    %1582 = vmatprep.subr.mxu0 0.0
    %1583 = vmatpush1.msra.mxu0 0.0
    %1584 = vmatprep.subr.mxu0 0.0
    %1585 = vmatpush1.msra.mxu0 0.0
    %1586 = vmatprep.subr.mxu0 0.0
    %1587 = vmatpush1.msra.mxu0 0.0
    %1588 = vmatprep.subr.mxu0 0.0
    %1589 = vmatpush1.msra.mxu0 0.0
    %1590 = vmatprep.subr.mxu0 0.0
    %1591 = vmatpush1.msra.mxu0 0.0
    %1592 = vmatprep.subr.mxu0 0.0
    %1593 = vmatpush1.msra.mxu0 0.0
    %1594 = vmatprep.subr.mxu0 0.0
    %1595 = vmatpush1.msra.mxu0 0.0
    %1596 = vmatprep.subr.mxu0 0.0
    %1597 = vmatpush1.msra.mxu0 0.0
    %1598 = vmatprep.subr.mxu0 0.0
    %1599 = vmatpush1.msra.mxu0 0.0
    %1600 = vmatprep.subr.mxu0 0.0
    %1601 = vmatpush1.msra.mxu0 0.0
    %1602 = vmatprep.subr.mxu0 0.0
    %1603 = vmatpush1.msra.mxu0 0.0
    %1604 = vmatprep.subr.mxu0 0.0
    %1605 = vmatpush1.msra.mxu0 0.0
    %1606 = vmatprep.subr.mxu0 0.0
    %1607 = vmatpush1.msra.mxu0 0.0
    %1608 = vmatprep.subr.mxu0 0.0
    %1609 = vmatpush1.msra.mxu0 0.0
    %1610 = vmatprep.mubr.f32.mxu0 0.0
    %1611 = vmatmul.mubr.f32.gmra.mrb[0].mxu0 %v1541
    %v1612 = vpop.f32.mrb[0].mxu0
    %v1613 = vadd.f32 0.0, %v1612
    %v1614 = vpop.f32.mrb[0].mxu0
    %v1615 = vadd.f32 0.0, %v1614
    %1616 = vmatprep.mubr.f32.mxu0 0.0
    %1617 = vmatmul.mubr.f32.gmra.mrb[0].mxu0 %v1544
    %v1618 = vpop.f32.mrb[0].mxu0
    %v1619 = vadd.f32 0.0, %v1618
    %v1620 = vpop.f32.mrb[0].mxu0
    %v1621 = vadd.f32 0.0, %v1620
    %1622 = vdwg.mxu0
    %v1623 = vadd.f32 %v1533, %v1613
    %v1624 = vadd.f32 %v1534, %v1615
    %v1625 = vadd.f32 %v1535, %v1619
    %v1626 = vadd.f32 %v1536, %v1621
    %v1627 = vmax.f32 %v1623, 0.0
    %v1628 = vmax.f32 %v1624, 0.0
    %v1629 = vmax.f32 %v1625, 0.0
    %v1630 = vmax.f32 %v1626, 0.0
    %1631 = vmatprep.subr.mxu0 %v1156
    %1632 = vmatpush1.msra.mxu0 %v1155
    %1633 = vmatprep.subr.mxu0 %v1158
    %1634 = vmatpush1.msra.mxu0 %v1157
    %1635 = vmatprep.subr.mxu0 0.0
    %1636 = vmatpush1.msra.mxu0 0.0
    %1637 = vmatprep.subr.mxu0 0.0
    %1638 = vmatpush1.msra.mxu0 0.0
    %1639 = vmatprep.subr.mxu0 0.0
    %1640 = vmatpush1.msra.mxu0 0.0
    %1641 = vmatprep.subr.mxu0 0.0
    %1642 = vmatpush1.msra.mxu0 0.0
    %1643 = vmatprep.subr.mxu0 0.0
    %1644 = vmatpush1.msra.mxu0 0.0
    %1645 = vmatprep.subr.mxu0 0.0
    %1646 = vmatpush1.msra.mxu0 0.0
    %1647 = vmatprep.subr.mxu0 0.0
    %1648 = vmatpush1.msra.mxu0 0.0
    %1649 = vmatprep.subr.mxu0 0.0
    %1650 = vmatpush1.msra.mxu0 0.0
    %1651 = vmatprep.subr.mxu0 0.0
    %1652 = vmatpush1.msra.mxu0 0.0
    %1653 = vmatprep.subr.mxu0 0.0
    %1654 = vmatpush1.msra.mxu0 0.0
    %1655 = vmatprep.subr.mxu0 0.0
    %1656 = vmatpush1.msra.mxu0 0.0
    %1657 = vmatprep.subr.mxu0 0.0
    %1658 = vmatpush1.msra.mxu0 0.0
    %1659 = vmatprep.subr.mxu0 0.0
    %1660 = vmatpush1.msra.mxu0 0.0
    %1661 = vmatprep.subr.mxu0 0.0
    %1662 = vmatpush1.msra.mxu0 0.0
    %1663 = vmatprep.subr.mxu0 0.0
    %1664 = vmatpush1.msra.mxu0 0.0
    %1665 = vmatprep.subr.mxu0 0.0
    %1666 = vmatpush1.msra.mxu0 0.0
    %1667 = vmatprep.subr.mxu0 0.0
    %1668 = vmatpush1.msra.mxu0 0.0
    %1669 = vmatprep.subr.mxu0 0.0
    %1670 = vmatpush1.msra.mxu0 0.0
    %1671 = vmatprep.subr.mxu0 0.0
    %1672 = vmatpush1.msra.mxu0 0.0
    %1673 = vmatprep.subr.mxu0 0.0
    %1674 = vmatpush1.msra.mxu0 0.0
    %1675 = vmatprep.subr.mxu0 0.0
    %1676 = vmatpush1.msra.mxu0 0.0
    %1677 = vmatprep.subr.mxu0 0.0
    %1678 = vmatpush1.msra.mxu0 0.0
    %1679 = vmatprep.subr.mxu0 0.0
    %1680 = vmatpush1.msra.mxu0 0.0
    %1681 = vmatprep.subr.mxu0 0.0
    %1682 = vmatpush1.msra.mxu0 0.0
    %1683 = vmatprep.subr.mxu0 0.0
    %1684 = vmatpush1.msra.mxu0 0.0
    %1685 = vmatprep.subr.mxu0 0.0
    %1686 = vmatpush1.msra.mxu0 0.0
    %1687 = vmatprep.subr.mxu0 0.0
    %1688 = vmatpush1.msra.mxu0 0.0
    %1689 = vmatprep.subr.mxu0 0.0
    %1690 = vmatpush1.msra.mxu0 0.0
    %1691 = vmatprep.subr.mxu0 0.0
    %1692 = vmatpush1.msra.mxu0 0.0
    %1693 = vmatprep.subr.mxu0 0.0
    %1694 = vmatpush1.msra.mxu0 0.0
    %1695 = vmatprep.mubr.f32.mxu0 0.0
    %1696 = vmatmul.mubr.f32.gmra.mrb[0].mxu0 %v591
    %v1697 = vpop.f32.mrb[0].mxu0
    %v1698 = vadd.f32 0.0, %v1697
    %v1699 = vpop.f32.mrb[0].mxu0
    %v1700 = vadd.f32 0.0, %v1699
    %1701 = vmatprep.mubr.f32.mxu0 0.0
    %1702 = vmatmul.mubr.f32.gmra.mrb[0].mxu0 %v594
    %v1703 = vpop.f32.mrb[0].mxu0
    %v1704 = vadd.f32 0.0, %v1703
    %v1705 = vpop.f32.mrb[0].mxu0
    %v1706 = vadd.f32 0.0, %v1705
    %1707 = vdwg.mxu0
    %v1708 = vadd.f32 %v1627, %v1698
    %v1709 = vadd.f32 %v1628, %v1700
    %v1710 = vadd.f32 %v1629, %v1704
    %v1711 = vadd.f32 %v1630, %v1706
    %s1712 = scalar_lea.vmem %s1, 224
    %v1713 = vld [vmem:[%s1712] sm:$0xff]
    %v1714 = vld [vmem:[%s1712 + $0x8] sm:$0xff]
    %v1716 = vsel %vm115, %v1713, 0
    %v1719 = vsel %vm115, %v1714, 0
    %1721 = vmatprep.subr.mxu0 %v1709
    %1722 = vmatpush1.msra.mxu0 %v1708
    %1723 = vmatprep.subr.mxu0 %v1711
    %1724 = vmatpush1.msra.mxu0 %v1710
    %1725 = vmatprep.subr.mxu0 0.0
    %1726 = vmatpush1.msra.mxu0 0.0
    %1727 = vmatprep.subr.mxu0 0.0
    %1728 = vmatpush1.msra.mxu0 0.0
    %1729 = vmatprep.subr.mxu0 0.0
    %1730 = vmatpush1.msra.mxu0 0.0
    %1731 = vmatprep.subr.mxu0 0.0
    %1732 = vmatpush1.msra.mxu0 0.0
    %1733 = vmatprep.subr.mxu0 0.0
    %1734 = vmatpush1.msra.mxu0 0.0
    %1735 = vmatprep.subr.mxu0 0.0
    %1736 = vmatpush1.msra.mxu0 0.0
    %1737 = vmatprep.subr.mxu0 0.0
    %1738 = vmatpush1.msra.mxu0 0.0
    %1739 = vmatprep.subr.mxu0 0.0
    %1740 = vmatpush1.msra.mxu0 0.0
    %1741 = vmatprep.subr.mxu0 0.0
    %1742 = vmatpush1.msra.mxu0 0.0
    %1743 = vmatprep.subr.mxu0 0.0
    %1744 = vmatpush1.msra.mxu0 0.0
    %1745 = vmatprep.subr.mxu0 0.0
    %1746 = vmatpush1.msra.mxu0 0.0
    %1747 = vmatprep.subr.mxu0 0.0
    %1748 = vmatpush1.msra.mxu0 0.0
    %1749 = vmatprep.subr.mxu0 0.0
    %1750 = vmatpush1.msra.mxu0 0.0
    %1751 = vmatprep.subr.mxu0 0.0
    %1752 = vmatpush1.msra.mxu0 0.0
    %1753 = vmatprep.subr.mxu0 0.0
    %1754 = vmatpush1.msra.mxu0 0.0
    %1755 = vmatprep.subr.mxu0 0.0
    %1756 = vmatpush1.msra.mxu0 0.0
    %1757 = vmatprep.subr.mxu0 0.0
    %1758 = vmatpush1.msra.mxu0 0.0
    %1759 = vmatprep.subr.mxu0 0.0
    %1760 = vmatpush1.msra.mxu0 0.0
    %1761 = vmatprep.subr.mxu0 0.0
    %1762 = vmatpush1.msra.mxu0 0.0
    %1763 = vmatprep.subr.mxu0 0.0
    %1764 = vmatpush1.msra.mxu0 0.0
    %1765 = vmatprep.subr.mxu0 0.0
    %1766 = vmatpush1.msra.mxu0 0.0
    %1767 = vmatprep.subr.mxu0 0.0
    %1768 = vmatpush1.msra.mxu0 0.0
    %1769 = vmatprep.subr.mxu0 0.0
    %1770 = vmatpush1.msra.mxu0 0.0
    %1771 = vmatprep.subr.mxu0 0.0
    %1772 = vmatpush1.msra.mxu0 0.0
    %1773 = vmatprep.subr.mxu0 0.0
    %1774 = vmatpush1.msra.mxu0 0.0
    %1775 = vmatprep.subr.mxu0 0.0
    %1776 = vmatpush1.msra.mxu0 0.0
    %1777 = vmatprep.subr.mxu0 0.0
    %1778 = vmatpush1.msra.mxu0 0.0
    %1779 = vmatprep.subr.mxu0 0.0
    %1780 = vmatpush1.msra.mxu0 0.0
    %1781 = vmatprep.subr.mxu0 0.0
    %1782 = vmatpush1.msra.mxu0 0.0
    %1783 = vmatprep.subr.mxu0 0.0
    %1784 = vmatpush1.msra.mxu0 0.0
    %1785 = vmatprep.mubr.f32.mxu0 0.0
    %1786 = vmatmul.mubr.f32.gmra.mrb[0].mxu0 %v1716
    %v1787 = vpop.f32.mrb[0].mxu0
    %v1788 = vadd.f32 0.0, %v1787
    %v1789 = vpop.f32.mrb[0].mxu0
    %v1790 = vadd.f32 0.0, %v1789
    %1791 = vmatprep.mubr.f32.mxu0 0.0
    %1792 = vmatmul.mubr.f32.gmra.mrb[0].mxu0 %v1719
    %v1793 = vpop.f32.mrb[0].mxu0
    %v1794 = vadd.f32 0.0, %v1793
    %v1795 = vpop.f32.mrb[0].mxu0
    %v1796 = vadd.f32 0.0, %v1795
    %1797 = vdwg.mxu0
    %1798 = vrot.lane.b32.xlu0 %v1788, 1
    %v1799 = vpop.permute.xlu0 %1798
    %1800 = vrot.lane.b32.xlu0 %v1794, 1
    %v1801 = vpop.permute.xlu0 %1800
    %1802 = vrot.lane.b32.xlu0 %v1790, 1
    %v1803 = vpop.permute.xlu0 %1802
    %1804 = vrot.lane.b32.xlu0 %v1796, 1
    %v1805 = vpop.permute.xlu0 %1804
    %v1806 = vsel %vm207, %v1799, %v1803
    %v1807 = vsel %vm207, %v1801, %v1805
    %v1808 = vsel %vm207, %v1803, %v1799
    %v1809 = vsel %vm207, %v1805, %v1801
    %v1810 = vmul.f32 %v1808, %v110
    %v1811 = vmul.f32 %v1806, %v111
    %v1812 = vmul.f32 %v1809, %v110
    %v1813 = vmul.f32 %v1807, %v111
    %s1814 = scalar_lea.vmem %s1, 240
    %v1815 = vld [vmem:[%s1814] sm:$0xff]
    %v1816 = vld [vmem:[%s1814 + $0x8] sm:$0xff]
    %v1818 = vsel %vm115, %v1815, 0
    %v1821 = vsel %vm115, %v1816, 0
    %1823 = vmatprep.subr.mxu0 %v1709
    %1824 = vmatpush1.msra.mxu0 %v1708
    %1825 = vmatprep.subr.mxu0 %v1711
    %1826 = vmatpush1.msra.mxu0 %v1710
    %1827 = vmatprep.subr.mxu0 0.0
    %1828 = vmatpush1.msra.mxu0 0.0
    %1829 = vmatprep.subr.mxu0 0.0
    %1830 = vmatpush1.msra.mxu0 0.0
    %1831 = vmatprep.subr.mxu0 0.0
    %1832 = vmatpush1.msra.mxu0 0.0
    %1833 = vmatprep.subr.mxu0 0.0
    %1834 = vmatpush1.msra.mxu0 0.0
    %1835 = vmatprep.subr.mxu0 0.0
    %1836 = vmatpush1.msra.mxu0 0.0
    %1837 = vmatprep.subr.mxu0 0.0
    %1838 = vmatpush1.msra.mxu0 0.0
    %1839 = vmatprep.subr.mxu0 0.0
    %1840 = vmatpush1.msra.mxu0 0.0
    %1841 = vmatprep.subr.mxu0 0.0
    %1842 = vmatpush1.msra.mxu0 0.0
    %1843 = vmatprep.subr.mxu0 0.0
    %1844 = vmatpush1.msra.mxu0 0.0
    %1845 = vmatprep.subr.mxu0 0.0
    %1846 = vmatpush1.msra.mxu0 0.0
    %1847 = vmatprep.subr.mxu0 0.0
    %1848 = vmatpush1.msra.mxu0 0.0
    %1849 = vmatprep.subr.mxu0 0.0
    %1850 = vmatpush1.msra.mxu0 0.0
    %1851 = vmatprep.subr.mxu0 0.0
    %1852 = vmatpush1.msra.mxu0 0.0
    %1853 = vmatprep.subr.mxu0 0.0
    %1854 = vmatpush1.msra.mxu0 0.0
    %1855 = vmatprep.subr.mxu0 0.0
    %1856 = vmatpush1.msra.mxu0 0.0
    %1857 = vmatprep.subr.mxu0 0.0
    %1858 = vmatpush1.msra.mxu0 0.0
    %1859 = vmatprep.subr.mxu0 0.0
    %1860 = vmatpush1.msra.mxu0 0.0
    %1861 = vmatprep.subr.mxu0 0.0
    %1862 = vmatpush1.msra.mxu0 0.0
    %1863 = vmatprep.subr.mxu0 0.0
    %1864 = vmatpush1.msra.mxu0 0.0
    %1865 = vmatprep.subr.mxu0 0.0
    %1866 = vmatpush1.msra.mxu0 0.0
    %1867 = vmatprep.subr.mxu0 0.0
    %1868 = vmatpush1.msra.mxu0 0.0
    %1869 = vmatprep.subr.mxu0 0.0
    %1870 = vmatpush1.msra.mxu0 0.0
    %1871 = vmatprep.subr.mxu0 0.0
    %1872 = vmatpush1.msra.mxu0 0.0
    %1873 = vmatprep.subr.mxu0 0.0
    %1874 = vmatpush1.msra.mxu0 0.0
    %1875 = vmatprep.subr.mxu0 0.0
    %1876 = vmatpush1.msra.mxu0 0.0
    %1877 = vmatprep.subr.mxu0 0.0
    %1878 = vmatpush1.msra.mxu0 0.0
    %1879 = vmatprep.subr.mxu0 0.0
    %1880 = vmatpush1.msra.mxu0 0.0
    %1881 = vmatprep.subr.mxu0 0.0
    %1882 = vmatpush1.msra.mxu0 0.0
    %1883 = vmatprep.subr.mxu0 0.0
    %1884 = vmatpush1.msra.mxu0 0.0
    %1885 = vmatprep.subr.mxu0 0.0
    %1886 = vmatpush1.msra.mxu0 0.0
    %1887 = vmatprep.mubr.f32.mxu0 0.0
    %1888 = vmatmul.mubr.f32.gmra.mrb[0].mxu0 %v1818
    %v1889 = vpop.f32.mrb[0].mxu0
    %v1890 = vadd.f32 0.0, %v1889
    %v1891 = vpop.f32.mrb[0].mxu0
    %v1892 = vadd.f32 0.0, %v1891
    %1893 = vmatprep.mubr.f32.mxu0 0.0
    %1894 = vmatmul.mubr.f32.gmra.mrb[0].mxu0 %v1821
    %v1895 = vpop.f32.mrb[0].mxu0
    %v1896 = vadd.f32 0.0, %v1895
    %v1897 = vpop.f32.mrb[0].mxu0
    %v1898 = vadd.f32 0.0, %v1897
    %1899 = vdwg.mxu0
    %v1900 = vadd.f32 %v1810, %v1890
    %v1901 = vadd.f32 %v1811, %v1892
    %v1902 = vadd.f32 %v1812, %v1896
    %v1903 = vadd.f32 %v1813, %v1898
    %v1904 = vmax.f32 %v1900, 0.0
    %v1905 = vmax.f32 %v1901, 0.0
    %v1906 = vmax.f32 %v1902, 0.0
    %v1907 = vmax.f32 %v1903, 0.0
    %s1908 = scalar_lea.vmem %s1, 256
    %v1909 = vld [vmem:[%s1908] sm:$0xff]
    %v1910 = vld [vmem:[%s1908 + $0x8] sm:$0xff]
    %v1912 = vsel %vm115, %v1909, 0
    %v1915 = vsel %vm115, %v1910, 0
    %1917 = vmatprep.subr.mxu0 %v1905
    %1918 = vmatpush1.msra.mxu0 %v1904
    %1919 = vmatprep.subr.mxu0 %v1907
    %1920 = vmatpush1.msra.mxu0 %v1906
    %1921 = vmatprep.subr.mxu0 0.0
    %1922 = vmatpush1.msra.mxu0 0.0
    %1923 = vmatprep.subr.mxu0 0.0
    %1924 = vmatpush1.msra.mxu0 0.0
    %1925 = vmatprep.subr.mxu0 0.0
    %1926 = vmatpush1.msra.mxu0 0.0
    %1927 = vmatprep.subr.mxu0 0.0
    %1928 = vmatpush1.msra.mxu0 0.0
    %1929 = vmatprep.subr.mxu0 0.0
    %1930 = vmatpush1.msra.mxu0 0.0
    %1931 = vmatprep.subr.mxu0 0.0
    %1932 = vmatpush1.msra.mxu0 0.0
    %1933 = vmatprep.subr.mxu0 0.0
    %1934 = vmatpush1.msra.mxu0 0.0
    %1935 = vmatprep.subr.mxu0 0.0
    %1936 = vmatpush1.msra.mxu0 0.0
    %1937 = vmatprep.subr.mxu0 0.0
    %1938 = vmatpush1.msra.mxu0 0.0
    %1939 = vmatprep.subr.mxu0 0.0
    %1940 = vmatpush1.msra.mxu0 0.0
    %1941 = vmatprep.subr.mxu0 0.0
    %1942 = vmatpush1.msra.mxu0 0.0
    %1943 = vmatprep.subr.mxu0 0.0
    %1944 = vmatpush1.msra.mxu0 0.0
    %1945 = vmatprep.subr.mxu0 0.0
    %1946 = vmatpush1.msra.mxu0 0.0
    %1947 = vmatprep.subr.mxu0 0.0
    %1948 = vmatpush1.msra.mxu0 0.0
    %1949 = vmatprep.subr.mxu0 0.0
    %1950 = vmatpush1.msra.mxu0 0.0
    %1951 = vmatprep.subr.mxu0 0.0
    %1952 = vmatpush1.msra.mxu0 0.0
    %1953 = vmatprep.subr.mxu0 0.0
    %1954 = vmatpush1.msra.mxu0 0.0
    %1955 = vmatprep.subr.mxu0 0.0
    %1956 = vmatpush1.msra.mxu0 0.0
    %1957 = vmatprep.subr.mxu0 0.0
    %1958 = vmatpush1.msra.mxu0 0.0
    %1959 = vmatprep.subr.mxu0 0.0
    %1960 = vmatpush1.msra.mxu0 0.0
    %1961 = vmatprep.subr.mxu0 0.0
    %1962 = vmatpush1.msra.mxu0 0.0
    %1963 = vmatprep.subr.mxu0 0.0
    %1964 = vmatpush1.msra.mxu0 0.0
    %1965 = vmatprep.subr.mxu0 0.0
    %1966 = vmatpush1.msra.mxu0 0.0
    %1967 = vmatprep.subr.mxu0 0.0
    %1968 = vmatpush1.msra.mxu0 0.0
    %1969 = vmatprep.subr.mxu0 0.0
    %1970 = vmatpush1.msra.mxu0 0.0
    %1971 = vmatprep.subr.mxu0 0.0
    %1972 = vmatpush1.msra.mxu0 0.0
    %1973 = vmatprep.subr.mxu0 0.0
    %1974 = vmatpush1.msra.mxu0 0.0
    %1975 = vmatprep.subr.mxu0 0.0
    %1976 = vmatpush1.msra.mxu0 0.0
    %1977 = vmatprep.subr.mxu0 0.0
    %1978 = vmatpush1.msra.mxu0 0.0
    %1979 = vmatprep.subr.mxu0 0.0
    %1980 = vmatpush1.msra.mxu0 0.0
    %1981 = vmatprep.mubr.f32.mxu0 0.0
    %1982 = vmatmul.mubr.f32.gmra.mrb[0].mxu0 %v1912
    %v1983 = vpop.f32.mrb[0].mxu0
    %v1984 = vadd.f32 0.0, %v1983
    %v1985 = vpop.f32.mrb[0].mxu0
    %v1986 = vadd.f32 0.0, %v1985
    %1987 = vmatprep.mubr.f32.mxu0 0.0
    %1988 = vmatmul.mubr.f32.gmra.mrb[0].mxu0 %v1915
    %v1989 = vpop.f32.mrb[0].mxu0
    %v1990 = vpop.f32.mrb[0].mxu0
    %1991 = vdwg.mxu0
    %1992 = vrot.lane.b32.xlu0 %v1984, 1
    %v1993 = vpop.permute.xlu0 %1992
    %1994 = vrot.lane.b32.xlu0 %v1986, 1
    %v1995 = vpop.permute.xlu0 %1994
    %v1996 = vsel %vm207, %v1993, %v1995
    %v1997 = vsel %vm207, %v1995, %v1993
    %v1998 = vmul.f32 %v1997, %v110
    %v1999 = vmul.f32 %v1996, %v111
    %s2000 = scalar_lea.vmem %s1, 272
    %v2001 = vld [vmem:[%s2000] sm:$0xff]
    %v2002 = vld [vmem:[%s2000 + $0x8] sm:$0xff]
    %v2004 = vsel %vm115, %v2001, 0
    %v2007 = vsel %vm115, %v2002, 0
    %2009 = vmatprep.subr.mxu0 %v1905
    %2010 = vmatpush1.msra.mxu0 %v1904
    %2011 = vmatprep.subr.mxu0 %v1907
    %2012 = vmatpush1.msra.mxu0 %v1906
    %2013 = vmatprep.subr.mxu0 0.0
    %2014 = vmatpush1.msra.mxu0 0.0
    %2015 = vmatprep.subr.mxu0 0.0
    %2016 = vmatpush1.msra.mxu0 0.0
    %2017 = vmatprep.subr.mxu0 0.0
    %2018 = vmatpush1.msra.mxu0 0.0
    %2019 = vmatprep.subr.mxu0 0.0
    %2020 = vmatpush1.msra.mxu0 0.0
    %2021 = vmatprep.subr.mxu0 0.0
    %2022 = vmatpush1.msra.mxu0 0.0
    %2023 = vmatprep.subr.mxu0 0.0
    %2024 = vmatpush1.msra.mxu0 0.0
    %2025 = vmatprep.subr.mxu0 0.0
    %2026 = vmatpush1.msra.mxu0 0.0
    %2027 = vmatprep.subr.mxu0 0.0
    %2028 = vmatpush1.msra.mxu0 0.0
    %2029 = vmatprep.subr.mxu0 0.0
    %2030 = vmatpush1.msra.mxu0 0.0
    %2031 = vmatprep.subr.mxu0 0.0
    %2032 = vmatpush1.msra.mxu0 0.0
    %2033 = vmatprep.subr.mxu0 0.0
    %2034 = vmatpush1.msra.mxu0 0.0
    %2035 = vmatprep.subr.mxu0 0.0
    %2036 = vmatpush1.msra.mxu0 0.0
    %2037 = vmatprep.subr.mxu0 0.0
    %2038 = vmatpush1.msra.mxu0 0.0
    %2039 = vmatprep.subr.mxu0 0.0
    %2040 = vmatpush1.msra.mxu0 0.0
    %2041 = vmatprep.subr.mxu0 0.0
    %2042 = vmatpush1.msra.mxu0 0.0
    %2043 = vmatprep.subr.mxu0 0.0
    %2044 = vmatpush1.msra.mxu0 0.0
    %2045 = vmatprep.subr.mxu0 0.0
    %2046 = vmatpush1.msra.mxu0 0.0
    %2047 = vmatprep.subr.mxu0 0.0
    %2048 = vmatpush1.msra.mxu0 0.0
    %2049 = vmatprep.subr.mxu0 0.0
    %2050 = vmatpush1.msra.mxu0 0.0
    %2051 = vmatprep.subr.mxu0 0.0
    %2052 = vmatpush1.msra.mxu0 0.0
    %2053 = vmatprep.subr.mxu0 0.0
    %2054 = vmatpush1.msra.mxu0 0.0
    %2055 = vmatprep.subr.mxu0 0.0
    %2056 = vmatpush1.msra.mxu0 0.0
    %2057 = vmatprep.subr.mxu0 0.0
    %2058 = vmatpush1.msra.mxu0 0.0
    %2059 = vmatprep.subr.mxu0 0.0
    %2060 = vmatpush1.msra.mxu0 0.0
    %2061 = vmatprep.subr.mxu0 0.0
    %2062 = vmatpush1.msra.mxu0 0.0
    %2063 = vmatprep.subr.mxu0 0.0
    %2064 = vmatpush1.msra.mxu0 0.0
    %2065 = vmatprep.subr.mxu0 0.0
    %2066 = vmatpush1.msra.mxu0 0.0
    %2067 = vmatprep.subr.mxu0 0.0
    %2068 = vmatpush1.msra.mxu0 0.0
    %2069 = vmatprep.subr.mxu0 0.0
    %2070 = vmatpush1.msra.mxu0 0.0
    %2071 = vmatprep.subr.mxu0 0.0
    %2072 = vmatpush1.msra.mxu0 0.0
    %2073 = vmatprep.mubr.f32.mxu0 0.0
    %2074 = vmatmul.mubr.f32.gmra.mrb[0].mxu0 %v2004
    %v2075 = vpop.f32.mrb[0].mxu0
    %v2076 = vadd.f32 0.0, %v2075
    %v2077 = vpop.f32.mrb[0].mxu0
    %v2078 = vadd.f32 0.0, %v2077
    %2079 = vmatprep.mubr.f32.mxu0 0.0
    %2080 = vmatmul.mubr.f32.gmra.mrb[0].mxu0 %v2007
    %v2081 = vpop.f32.mrb[0].mxu0
    %v2082 = vpop.f32.mrb[0].mxu0
    %2083 = vdwg.mxu0
    %v2084 = vadd.f32 %v1998, %v2076
    %v2085 = vadd.f32 %v1999, %v2078
    %v2086 = vmax.f32 %v2084, 0.0
    %v2087 = vmax.f32 %v2085, 0.0
    %s2088 = scalar_lea.vmem %s1, 288
    %v2089 = vld [vmem:[%s2088] sm:$0xff]
    %v2090 = vld [vmem:[%s2088 + $0x8] sm:$0xff]
    %v2092 = vsel %vm115, %v2089, 0
    %v2095 = vsel %vm115, %v2090, 0
    %2097 = vmatprep.subr.mxu0 %v1709
    %2098 = vmatpush1.msra.mxu0 %v1708
    %2099 = vmatprep.subr.mxu0 %v1711
    %2100 = vmatpush1.msra.mxu0 %v1710
    %2101 = vmatprep.subr.mxu0 0.0
    %2102 = vmatpush1.msra.mxu0 0.0
    %2103 = vmatprep.subr.mxu0 0.0
    %2104 = vmatpush1.msra.mxu0 0.0
    %2105 = vmatprep.subr.mxu0 0.0
    %2106 = vmatpush1.msra.mxu0 0.0
    %2107 = vmatprep.subr.mxu0 0.0
    %2108 = vmatpush1.msra.mxu0 0.0
    %2109 = vmatprep.subr.mxu0 0.0
    %2110 = vmatpush1.msra.mxu0 0.0
    %2111 = vmatprep.subr.mxu0 0.0
    %2112 = vmatpush1.msra.mxu0 0.0
    %2113 = vmatprep.subr.mxu0 0.0
    %2114 = vmatpush1.msra.mxu0 0.0
    %2115 = vmatprep.subr.mxu0 0.0
    %2116 = vmatpush1.msra.mxu0 0.0
    %2117 = vmatprep.subr.mxu0 0.0
    %2118 = vmatpush1.msra.mxu0 0.0
    %2119 = vmatprep.subr.mxu0 0.0
    %2120 = vmatpush1.msra.mxu0 0.0
    %2121 = vmatprep.subr.mxu0 0.0
    %2122 = vmatpush1.msra.mxu0 0.0
    %2123 = vmatprep.subr.mxu0 0.0
    %2124 = vmatpush1.msra.mxu0 0.0
    %2125 = vmatprep.subr.mxu0 0.0
    %2126 = vmatpush1.msra.mxu0 0.0
    %2127 = vmatprep.subr.mxu0 0.0
    %2128 = vmatpush1.msra.mxu0 0.0
    %2129 = vmatprep.subr.mxu0 0.0
    %2130 = vmatpush1.msra.mxu0 0.0
    %2131 = vmatprep.subr.mxu0 0.0
    %2132 = vmatpush1.msra.mxu0 0.0
    %2133 = vmatprep.subr.mxu0 0.0
    %2134 = vmatpush1.msra.mxu0 0.0
    %2135 = vmatprep.subr.mxu0 0.0
    %2136 = vmatpush1.msra.mxu0 0.0
    %2137 = vmatprep.subr.mxu0 0.0
    %2138 = vmatpush1.msra.mxu0 0.0
    %2139 = vmatprep.subr.mxu0 0.0
    %2140 = vmatpush1.msra.mxu0 0.0
    %2141 = vmatprep.subr.mxu0 0.0
    %2142 = vmatpush1.msra.mxu0 0.0
    %2143 = vmatprep.subr.mxu0 0.0
    %2144 = vmatpush1.msra.mxu0 0.0
    %2145 = vmatprep.subr.mxu0 0.0
    %2146 = vmatpush1.msra.mxu0 0.0
    %2147 = vmatprep.subr.mxu0 0.0
    %2148 = vmatpush1.msra.mxu0 0.0
    %2149 = vmatprep.subr.mxu0 0.0
    %2150 = vmatpush1.msra.mxu0 0.0
    %2151 = vmatprep.subr.mxu0 0.0
    %2152 = vmatpush1.msra.mxu0 0.0
    %2153 = vmatprep.subr.mxu0 0.0
    %2154 = vmatpush1.msra.mxu0 0.0
    %2155 = vmatprep.subr.mxu0 0.0
    %2156 = vmatpush1.msra.mxu0 0.0
    %2157 = vmatprep.subr.mxu0 0.0
    %2158 = vmatpush1.msra.mxu0 0.0
    %2159 = vmatprep.subr.mxu0 0.0
    %2160 = vmatpush1.msra.mxu0 0.0
    %2161 = vmatprep.mubr.f32.mxu0 0.0
    %2162 = vmatmul.mubr.f32.gmra.mrb[0].mxu0 %v2092
    %v2163 = vpop.f32.mrb[0].mxu0
    %v2164 = vadd.f32 0.0, %v2163
    %v2165 = vpop.f32.mrb[0].mxu0
    %v2166 = vadd.f32 0.0, %v2165
    %2167 = vmatprep.mubr.f32.mxu0 0.0
    %2168 = vmatmul.mubr.f32.gmra.mrb[0].mxu0 %v2095
    %v2169 = vpop.f32.mrb[0].mxu0
    %v2170 = vpop.f32.mrb[0].mxu0
    %2171 = vdwg.mxu0
    %v2172 = vadd.f32 %v2086, %v2164
    %v2173 = vadd.f32 %v2087, %v2166
    %v2174 = vld [vmem:[%s2] sm:$0xff]
    %v2175 = vld [vmem:[%s2 + $0x8] sm:$0xff]
    %v2176 = vld [vmem:[%s2 + $0x10] sm:$0xff]
    %v2177 = vld [vmem:[%s2 + $0x18] sm:$0xff]
    %v2178 = vld [vmem:[%s2 + $0x20] sm:$0xff]
    %v2179 = vld [vmem:[%s2 + $0x28] sm:$0xff]
    %v2180 = vld [vmem:[%s2 + $0x30] sm:$0xff]
    %v2181 = vld [vmem:[%s2 + $0x38] sm:$0xff]
    %v2182 = vld [vmem:[%s2 + $0x40] sm:$0xff]
    %v2183 = vld [vmem:[%s2 + $0x48] sm:$0xff]
    %v2184 = vld [vmem:[%s2 + $0x50] sm:$0xff]
    %v2185 = vld [vmem:[%s2 + $0x58] sm:$0xff]
    %v2186 = vld [vmem:[%s2 + $0x60] sm:$0xff]
    %v2187 = vld [vmem:[%s2 + $0x68] sm:$0xff]
    %v2188 = vld [vmem:[%s2 + $0x70] sm:$0xff]
    %v2189 = vld [vmem:[%s2 + $0x78] sm:$0xff]
    %v2190 = vld [vmem:[%s3] sm:$0x1]
    %2191 = vmatprep.subr.mxu0 0.0
    %2192 = vmatpush1.msra.mxu0 %v2174
    %2193 = vmatprep.subr.mxu0 0.0
    %2194 = vmatpush1.msra.mxu0 %v2175
    %2195 = vmatprep.subr.mxu0 0.0
    %2196 = vmatpush1.msra.mxu0 %v2176
    %2197 = vmatprep.subr.mxu0 0.0
    %2198 = vmatpush1.msra.mxu0 %v2177
    %2199 = vmatprep.subr.mxu0 0.0
    %2200 = vmatpush1.msra.mxu0 %v2178
    %2201 = vmatprep.subr.mxu0 0.0
    %2202 = vmatpush1.msra.mxu0 %v2179
    %2203 = vmatprep.subr.mxu0 0.0
    %2204 = vmatpush1.msra.mxu0 %v2180
    %2205 = vmatprep.subr.mxu0 0.0
    %2206 = vmatpush1.msra.mxu0 %v2181
    %2207 = vmatprep.subr.mxu0 0.0
    %2208 = vmatpush1.msra.mxu0 %v2182
    %2209 = vmatprep.subr.mxu0 0.0
    %2210 = vmatpush1.msra.mxu0 %v2183
    %2211 = vmatprep.subr.mxu0 0.0
    %2212 = vmatpush1.msra.mxu0 %v2184
    %2213 = vmatprep.subr.mxu0 0.0
    %2214 = vmatpush1.msra.mxu0 %v2185
    %2215 = vmatprep.subr.mxu0 0.0
    %2216 = vmatpush1.msra.mxu0 %v2186
    %2217 = vmatprep.subr.mxu0 0.0
    %2218 = vmatpush1.msra.mxu0 %v2187
    %2219 = vmatprep.subr.mxu0 0.0
    %2220 = vmatpush1.msra.mxu0 %v2188
    %2221 = vmatprep.subr.mxu0 0.0
    %2222 = vmatpush1.msra.mxu0 %v2189
    %2223 = vmatprep.subr.mxu0 0.0
    %2224 = vmatpush1.msra.mxu0 0.0
    %2225 = vmatprep.subr.mxu0 0.0
    %2226 = vmatpush1.msra.mxu0 0.0
    %2227 = vmatprep.subr.mxu0 0.0
    %2228 = vmatpush1.msra.mxu0 0.0
    %2229 = vmatprep.subr.mxu0 0.0
    %2230 = vmatpush1.msra.mxu0 0.0
    %2231 = vmatprep.subr.mxu0 0.0
    %2232 = vmatpush1.msra.mxu0 0.0
    %2233 = vmatprep.subr.mxu0 0.0
    %2234 = vmatpush1.msra.mxu0 0.0
    %2235 = vmatprep.subr.mxu0 0.0
    %2236 = vmatpush1.msra.mxu0 0.0
    %2237 = vmatprep.subr.mxu0 0.0
    %2238 = vmatpush1.msra.mxu0 0.0
    %2239 = vmatprep.subr.mxu0 0.0
    %2240 = vmatpush1.msra.mxu0 0.0
    %2241 = vmatprep.subr.mxu0 0.0
    %2242 = vmatpush1.msra.mxu0 0.0
    %2243 = vmatprep.subr.mxu0 0.0
    %2244 = vmatpush1.msra.mxu0 0.0
    %2245 = vmatprep.subr.mxu0 0.0
    %2246 = vmatpush1.msra.mxu0 0.0
    %2247 = vmatprep.subr.mxu0 0.0
    %2248 = vmatpush1.msra.mxu0 0.0
    %2249 = vmatprep.subr.mxu0 0.0
    %2250 = vmatpush1.msra.mxu0 0.0
    %2251 = vmatprep.subr.mxu0 0.0
    %2252 = vmatpush1.msra.mxu0 0.0
    %2253 = vmatprep.subr.mxu0 0.0
    %2254 = vmatpush1.msra.mxu0 0.0
    %2255 = vmatprep.mubr.f32.mxu0 0.0
    %2256 = vmatmul.mubr.f32.gmra.mrb[0].mxu0 %v2172
    %v2257 = vpop.f32.mrb[0].mxu0
    %v2258 = vadd.f32 %v2190, %v2257
    %v2259 = vpop.f32.mrb[0].mxu0
    %2260 = vdwg.mxu0
    %v2261 = vxor.u32 %v2258, 2147483648
    %v2262 = vmul.f32 %v2261, 1.442695
    %v2263 = vpow.pop %v2262
    %v2264 = vadd.f32 %v2263, 1.0
    %v2265 = vrcp.pop %v2264
    %v2266 = vmul.f32 1.0, %v2265
    %2267 = vst [vmem:[#allocation2] sm:$0x1] %v2266
    %2268 = vmatprep.subr.mxu0 0.0
    %2269 = vmatpush1.msra.mxu0 %v2174
    %2270 = vmatprep.subr.mxu0 0.0
    %2271 = vmatpush1.msra.mxu0 %v2175
    %2272 = vmatprep.subr.mxu0 0.0
    %2273 = vmatpush1.msra.mxu0 %v2176
    %2274 = vmatprep.subr.mxu0 0.0
    %2275 = vmatpush1.msra.mxu0 %v2177
    %2276 = vmatprep.subr.mxu0 0.0
    %2277 = vmatpush1.msra.mxu0 %v2178
    %2278 = vmatprep.subr.mxu0 0.0
    %2279 = vmatpush1.msra.mxu0 %v2179
    %2280 = vmatprep.subr.mxu0 0.0
    %2281 = vmatpush1.msra.mxu0 %v2180
    %2282 = vmatprep.subr.mxu0 0.0
    %2283 = vmatpush1.msra.mxu0 %v2181
    %2284 = vmatprep.subr.mxu0 0.0
    %2285 = vmatpush1.msra.mxu0 %v2182
    %2286 = vmatprep.subr.mxu0 0.0
    %2287 = vmatpush1.msra.mxu0 %v2183
    %2288 = vmatprep.subr.mxu0 0.0
    %2289 = vmatpush1.msra.mxu0 %v2184
    %2290 = vmatprep.subr.mxu0 0.0
    %2291 = vmatpush1.msra.mxu0 %v2185
    %2292 = vmatprep.subr.mxu0 0.0
    %2293 = vmatpush1.msra.mxu0 %v2186
    %2294 = vmatprep.subr.mxu0 0.0
    %2295 = vmatpush1.msra.mxu0 %v2187
    %2296 = vmatprep.subr.mxu0 0.0
    %2297 = vmatpush1.msra.mxu0 %v2188
    %2298 = vmatprep.subr.mxu0 0.0
    %2299 = vmatpush1.msra.mxu0 %v2189
    %2300 = vmatprep.subr.mxu0 0.0
    %2301 = vmatpush1.msra.mxu0 0.0
    %2302 = vmatprep.subr.mxu0 0.0
    %2303 = vmatpush1.msra.mxu0 0.0
    %2304 = vmatprep.subr.mxu0 0.0
    %2305 = vmatpush1.msra.mxu0 0.0
    %2306 = vmatprep.subr.mxu0 0.0
    %2307 = vmatpush1.msra.mxu0 0.0
    %2308 = vmatprep.subr.mxu0 0.0
    %2309 = vmatpush1.msra.mxu0 0.0
    %2310 = vmatprep.subr.mxu0 0.0
    %2311 = vmatpush1.msra.mxu0 0.0
    %2312 = vmatprep.subr.mxu0 0.0
    %2313 = vmatpush1.msra.mxu0 0.0
    %2314 = vmatprep.subr.mxu0 0.0
    %2315 = vmatpush1.msra.mxu0 0.0
    %2316 = vmatprep.subr.mxu0 0.0
    %2317 = vmatpush1.msra.mxu0 0.0
    %2318 = vmatprep.subr.mxu0 0.0
    %2319 = vmatpush1.msra.mxu0 0.0
    %2320 = vmatprep.subr.mxu0 0.0
    %2321 = vmatpush1.msra.mxu0 0.0
    %2322 = vmatprep.subr.mxu0 0.0
    %2323 = vmatpush1.msra.mxu0 0.0
    %2324 = vmatprep.subr.mxu0 0.0
    %2325 = vmatpush1.msra.mxu0 0.0
    %2326 = vmatprep.subr.mxu0 0.0
    %2327 = vmatpush1.msra.mxu0 0.0
    %2328 = vmatprep.subr.mxu0 0.0
    %2329 = vmatpush1.msra.mxu0 0.0
    %2330 = vmatprep.subr.mxu0 0.0
    %2331 = vmatpush1.msra.mxu0 0.0
    %2332 = vmatprep.mubr.f32.mxu0 0.0
    %2333 = vmatmul.mubr.f32.gmra.mrb[0].mxu0 %v2173
    %v2334 = vpop.f32.mrb[0].mxu0
    %v2335 = vadd.f32 %v2190, %v2334
    %v2336 = vpop.f32.mrb[0].mxu0
    %2337 = vdwg.mxu0
    %v2338 = vxor.u32 %v2335, 2147483648
    %v2339 = vmul.f32 %v2338, 1.442695
    %v2340 = vpow.pop %v2339
    %v2341 = vadd.f32 %v2340, 1.0
    %v2342 = vrcp.pop %v2341
    %v2343 = vmul.f32 1.0, %v2342
    %2344 = vst [vmem:[#allocation2 + $0x1] sm:$0x1] %v2343
    // Predicated region
    $region18: #{multi_temporal_conv_net.1} parent=1 // pred_check
      _
    $region19: #{multi_temporal_conv_net.1} parent=1 // pred_check_branch
      %2346 = sbr.rel (0) target = $region21
    $region20: #{multi_temporal_conv_net.1} parent=1 // pred_region
      %s2348 = ssub.s32 32, 32
      %2349 = vsyncadd [#allocation3], %s2348
      %s2351 = sshll.u32 [#allocation2], 4
      %s2352 = int_to_ptr.vmem [resolvable:$true] %s2351
      %2354 = dma.vmem_to_hbm [thread:$0]  %s2352, 32, %s4, [#allocation3]
    $region21: #{multi_temporal_conv_net.1} parent=1 // pred_fallthru
      _
    // Predicated region
    $region22: #{multi_temporal_conv_net.1} parent=1 // pred_check
      _
    $region23: #{multi_temporal_conv_net.1} parent=1 // pred_check_branch
      %2356 = sbr.rel (0) target = $region25
    $region24: #{multi_temporal_conv_net.1} parent=1 // pred_region
      %2357 = dma.done [#allocation3], 32
    $region25: #{multi_temporal_conv_net.1} parent=1 // pred_fallthru
      _
    %2358 = vsyncpa [#allocation3], 1

</llo_original>
